<compile_context>
chip_gen: v5e
topology: v5e:2x2
jax: 0.10.0
libtpu: 0.0.40
codegen_flags: <defaults>
</compile_context>

<pallas_src>
import jax
import jax.numpy as jnp
from jax.experimental import pallas as pl
from jax.experimental.pallas import tpu as pltpu


# ------------------------------ model dimensions -----------------------------
BATCH = 2
SEQ = 8            # sequence length (role i is used at position i)
VOCAB = 10         # number of symbols
EMB = 8            # Symbol_embedding dim
HIDDEN = 20        # LSTM hidden_dim (module default)
N_FILLERS = 4
FILLER_DIM = 5
N_ROLES = 8        # must be >= SEQ because role_list[:, i] = i
ROLE_DIM = 6
FREE_DIM = 7
FINAL_WIDTH = 16   # final_layer_width -> has_last = 1, binder='tpr'

# ------------------------------ padded layout ---------------------------------
B_PAD = 8                      # batch padded to a full sublane tile
H_PAD = 32                     # hidden padded so fused gate blocks sit at 32-lane offsets
EMB_PAD = 16                   # EMB(8) + ones bias column + pad
NF_PAD = 16                    # filler-class / free-dim / output lane width (== FINAL_WIDTH)

# weight slab A (256 lanes) row offsets
A_WIHF = 0
A_WIHB = EMB_PAD
A_WHH = 2 * EMB_PAD
A_ROWS = 2 * EMB_PAD + 2 * H_PAD            # 96

# weight slab B (16 lanes) row offsets
B_WPRED = 0
B_WFIN = 2 * H_PAD                          # 64
B_BPRED = B_WFIN + (SEQ + 1) * NF_PAD       # 208
B_BLAST = B_BPRED + 1                       # 209
B_ROWS = B_BLAST + 1                        # 210


# --------------------------------- kernel -------------------------------------
def _filler_tpe_kernel(data_ref,    # (T*B_PAD + B_PAD, EMB_PAD): [x | ones | pad] rows, then state rows
                       wa_ref,      # (A_ROWS, 8*H_PAD): wih_fwd / wih_bwd (bias folded) / block-diag whh
                       wb_ref,      # (B_ROWS, NF_PAD): wpred / folded final weight / bpred / b_last
                       out_ref):    # (T*B_PAD + B_PAD, NF_PAD): preds rows, then final-layer rows
    f32 = jnp.float32
    T, BP, HP = SEQ, B_PAD, H_PAD
    TB = T * BP

    x = data_ref[0:TB, :]                                  # (TB, EMB_PAD)
    state = data_ref[TB:TB + BP, :]                        # (BP, NF_PAD)

    wih_f = wa_ref[A_WIHF:A_WIHF + EMB_PAD, :]             # (EMB_PAD, 8*HP) forward lanes only
    wih_b = wa_ref[A_WIHB:A_WIHB + EMB_PAD, :]             # (EMB_PAD, 8*HP) backward lanes only
    whh = wa_ref[A_WHH:A_WHH + 2 * HP, :]                  # (2*HP, 8*HP)    block-diag, both dirs

    # Hoisted input projections; biases folded via the ones column of x.
    # Gate column layout: [i_f|i_b|f_f|f_b|g_f|g_b|o_f|o_b], each block HP lanes.
    xg_f = jnp.dot(x, wih_f, preferred_element_type=f32)   # (TB, 8*HP), backward lanes are zero
    xg_b = jnp.dot(x, wih_b, preferred_element_type=f32)   # (TB, 8*HP), forward lanes are zero

    # Bidirectional recurrence: forward step t and backward step T-1-t share ONE
    # fused MXU push per step; h/c carry both directions as [fwd|bwd] lanes.
    h = jnp.zeros((BP, 2 * HP), f32)
    c = jnp.zeros((BP, 2 * HP), f32)
    hs = []
    for t in range(T):
        tb = T - 1 - t
        pre = (jnp.dot(h, whh, preferred_element_type=f32)
               + xg_f[t * BP:(t + 1) * BP, :]
               + xg_b[tb * BP:(tb + 1) * BP, :])           # (BP, 8*HP)
        i_g = jax.nn.sigmoid(pre[:, 0 * HP:2 * HP])        # [i_f | i_b]
        f_g = jax.nn.sigmoid(pre[:, 2 * HP:4 * HP])
        g_g = jnp.tanh(pre[:, 4 * HP:6 * HP])
        o_g = jax.nn.sigmoid(pre[:, 6 * HP:8 * HP])
        c = f_g * c + i_g * g_g
        h = o_g * jnp.tanh(c)
        hs.append(h)                                       # register-resident, no VMEM scratch

    # Bidirectional output at position p = [h_fwd(p) | h_bwd(p)]; h_bwd(p) was
    # produced at loop step T-1-p.  Pure lane-select (VPU), no lane movement.
    lane = jax.lax.broadcasted_iota(jnp.int32, (BP, 2 * HP), 1)
    is_fwd = lane < HP
    h_all = jnp.concatenate(
        [jnp.where(is_fwd, hs[p], hs[T - 1 - p]) for p in range(T)], axis=0)   # (TB, 2*HP)

    # Filler prediction head: Linear(2H -> n_fillers) + softmax.
    # Padded filler classes carry a -1e30 bias so their probability is exactly 0.
    wpred = wb_ref[B_WPRED:B_WPRED + 2 * HP, :]            # (2*HP, NF_PAD)
    bpred = wb_ref[B_BPRED:B_BPRED + 1, :]                 # (1, NF_PAD)
    logits = jnp.dot(h_all, wpred, preferred_element_type=f32) + bpred
    logits = logits - jnp.max(logits, axis=-1, keepdims=True)
    e = jnp.exp(logits)
    preds = e * pl.reciprocal(jnp.sum(e, axis=-1, keepdims=True), approx=True)
    out_ref[0:TB, :] = preds                               # (TB, NF_PAD)

    # TPR binding + final Linear collapsed to a single matmul:
    #   out[b] = concat_t(preds[t, b, :]) @ V  +  state[b] @ W_state  +  b_last
    # with filler_embedding and role_embedding pre-folded into V (in the wrapper).
    wide = jnp.concatenate(
        [preds[t * BP:(t + 1) * BP, :] for t in range(T)] + [state], axis=1)   # (BP, (T+1)*NF_PAD)
    w_fin = wb_ref[B_WFIN:B_WFIN + (T + 1) * NF_PAD, :]    # ((T+1)*NF_PAD, FINAL_WIDTH)
    b_last = wb_ref[B_BLAST:B_BLAST + 1, :]                # (1, FINAL_WIDTH)
    out_ref[TB:TB + BP, :] = jnp.dot(wide, w_fin, preferred_element_type=f32) + b_last


_VMEM = pl.BlockSpec(memory_space=pltpu.MemorySpace.VMEM)


# --------------------------------- wrapper ------------------------------------
@jax.jit
def filler_tpe_forward(seq_list, params, noise_key):
    B, T = seq_list.shape
    assert T == SEQ and B <= B_PAD and FINAL_WIDTH == NF_PAD
    f32 = jnp.float32

    # ---- data slab: time-major embedded rows (+ ones bias column), then state rows ----
    x = params['symbol_emb'][seq_list.T]                                   # (T, B, EMB)
    x = jnp.pad(x, ((0, 0), (0, B_PAD - B), (0, 0))).reshape(T * B_PAD, EMB)
    x = jnp.concatenate([x,
                         jnp.ones((T * B_PAD, 1), f32),
                         jnp.zeros((T * B_PAD, EMB_PAD - EMB - 1), f32)], axis=1)
    state = jax.random.normal(noise_key, (B, FREE_DIM), dtype=f32)         # torch.randn analogue
    state = jnp.pad(state, ((0, B_PAD - B), (0, NF_PAD - FREE_DIM)))
    data_slab = jnp.concatenate([x, state], axis=0)                        # (T*B_PAD + B_PAD, EMB_PAD)

    # ---- weight slab A (256 lanes): input projections (bias folded) + block-diag Whh ----
    wih_f = jnp.zeros((EMB_PAD, 8 * H_PAD), f32)
    wih_b = jnp.zeros((EMB_PAD, 8 * H_PAD), f32)
    whh = jnp.zeros((2 * H_PAD, 8 * H_PAD), f32)
    for g in range(4):                                   # PyTorch gate order i, f, g, o
        cf = g * 2 * H_PAD                               # forward gate block start
        cb = cf + H_PAD                                  # backward gate block start
        wih_f = wih_f.at[0:EMB, cf:cf + HIDDEN].set(params['wih_f'][g])
        wih_f = wih_f.at[EMB, cf:cf + HIDDEN].set(params['b_f'][g, 0])
        wih_b = wih_b.at[0:EMB, cb:cb + HIDDEN].set(params['wih_b'][g])
        wih_b = wih_b.at[EMB, cb:cb + HIDDEN].set(params['b_b'][g, 0])
        whh = whh.at[0:HIDDEN, cf:cf + HIDDEN].set(params['whh_f'][g])
        whh = whh.at[H_PAD:H_PAD + HIDDEN, cb:cb + HIDDEN].set(params['whh_b'][g])
    slab_a = jnp.concatenate([wih_f, wih_b, whh], axis=0)                  # (A_ROWS, 256)

    # ---- weight slab B (16 lanes): prediction head + role/filler-folded final layer ----
    wpred = jnp.zeros((2 * H_PAD, NF_PAD), f32)
    wpred = wpred.at[0:HIDDEN, 0:N_FILLERS].set(params['wpred_f'])
    wpred = wpred.at[H_PAD:H_PAD + HIDDEN, 0:N_FILLERS].set(params['wpred_b'])
    # v_eff[t, n, w] = sum_{f,r} filler_emb[n, f] * role_emb[t, r] * w_tpr[f, r, w]
    v_eff = jnp.einsum('nf,tr,frw->tnw', params['filler_emb'],
                       params['role_emb'][:T], params['w_tpr'])
    v_eff = jnp.pad(v_eff, ((0, 0), (0, NF_PAD - N_FILLERS), (0, 0)))
    w_fin = jnp.concatenate(
        [v_eff.reshape(T * NF_PAD, FINAL_WIDTH),
         jnp.pad(params['w_state'], ((0, NF_PAD - FREE_DIM), (0, 0)))], axis=0)
    bpred = jnp.concatenate(
        [params['bpred'], jnp.full((1, NF_PAD - N_FILLERS), -1e30, f32)], axis=1)
    slab_b = jnp.concatenate([wpred, w_fin, bpred, params['b_last']], axis=0)   # (B_ROWS, 16)

    res = pl.pallas_call(
        _filler_tpe_kernel,
        out_shape=jax.ShapeDtypeStruct((T * B_PAD + B_PAD, NF_PAD), f32),
        in_specs=[_VMEM, _VMEM, _VMEM],
        out_specs=_VMEM,
    )(data_slab, slab_a, slab_b)

    # slice off batch / class padding
    filler_predictions = res[0:T * B_PAD, 0:N_FILLERS].reshape(T, B_PAD, N_FILLERS)[:, 0:B, :]
    out_state = res[T * B_PAD:T * B_PAD + B, 0:FINAL_WIDTH][:, None, :]    # (B, 1, FINAL_WIDTH)
    return out_state, filler_predictions


# ------------------------------ parameter init --------------------------------
def init_params(key):
    ks = jax.random.split(key, 15)
    s = 0.1
    n = lambda k, shape: (jax.random.normal(k, shape, dtype=jnp.float32) * s)
    return {
        'symbol_emb': n(ks[0], (VOCAB, EMB)),
        'role_emb':   n(ks[1], (N_ROLES, ROLE_DIM)),
        'filler_emb': n(ks[2], (N_FILLERS, FILLER_DIM)),
        # LSTM weights pre-split per gate (PyTorch order i,f,g,o), stored
        # transposed (input_dim, H) for x @ W; bias = b_ih + b_hh per gate.
        'wih_f': n(ks[3], (4, EMB, HIDDEN)),
        'whh_f': n(ks[4], (4, HIDDEN, HIDDEN)),
        'b_f':   n(ks[5], (4, 1, HIDDEN)),
        'wih_b': n(ks[6], (4, EMB, HIDDEN)),
        'whh_b': n(ks[7], (4, HIDDEN, HIDDEN)),
        'b_b':   n(ks[8], (4, 1, HIDDEN)),
        # filler prediction head Linear(2H -> NF), split into fwd/bwd halves
        'wpred_f': n(ks[9], (HIDDEN, N_FILLERS)),
        'wpred_b': n(ks[10], (HIDDEN, N_FILLERS)),
        'bpred':   n(ks[11], (1, N_FILLERS)),
        # final layer Linear(FD*RD + FREE -> W), TPR half stored as (FD, RD, W)
        'w_tpr':   n(ks[12], (FILLER_DIM, ROLE_DIM, FINAL_WIDTH)),
        'w_state': n(ks[13], (FREE_DIM, FINAL_WIDTH)),
        'b_last':  n(ks[14], (1, FINAL_WIDTH)),
    }


if __name__ == "__main__":
    root = jax.random.PRNGKey(0)
    k_params, k_seq, k_noise = jax.random.split(root, 3)

    params = init_params(k_params)
    seq_list = jax.random.randint(k_seq, (BATCH, SEQ), 0, VOCAB, dtype=jnp.int32)

    out_state, filler_predictions = filler_tpe_forward(seq_list, params, k_noise)
    jax.block_until_ready((out_state, filler_predictions))

    assert out_state.shape == (BATCH, 1, FINAL_WIDTH), out_state.shape
    assert filler_predictions.shape == (SEQ, BATCH, N_FILLERS), filler_predictions.shape
    assert bool(jnp.all(jnp.isfinite(out_state)))
    assert bool(jnp.all(jnp.isfinite(filler_predictions)))

    print("KERNEL_OK")
</pallas_src>

<mosaic_0001>
module attributes {stable_mosaic.version = 11 : i64} {
  func.func @_filler_tpe_kernel(%arg0: memref<72x16xf32, #tpu.memory_space<vmem>>, %arg1: memref<96x256xf32, #tpu.memory_space<vmem>>, %arg2: memref<210x16xf32, #tpu.memory_space<vmem>>, %arg3: memref<72x16xf32, #tpu.memory_space<vmem>>) attributes {dimension_semantics = [], scalar_prefetch = 0 : i64, scratch_operands = 0 : i64, tpu.core_type = #tpu.core_type<tc>} {
    %c0 = arith.constant 0 : index
    %c0_0 = arith.constant 0 : index
    %0 = vector.load %arg0[%c0, %c0_0] : memref<72x16xf32, #tpu.memory_space<vmem>>, vector<64x16xf32>
    %c64 = arith.constant 64 : index
    %c0_1 = arith.constant 0 : index
    %1 = vector.load %arg0[%c64, %c0_1] : memref<72x16xf32, #tpu.memory_space<vmem>>, vector<8x16xf32>
    %c0_2 = arith.constant 0 : index
    %c0_3 = arith.constant 0 : index
    %2 = vector.load %arg1[%c0_2, %c0_3] : memref<96x256xf32, #tpu.memory_space<vmem>>, vector<16x256xf32>
    %c16 = arith.constant 16 : index
    %c0_4 = arith.constant 0 : index
    %3 = vector.load %arg1[%c16, %c0_4] : memref<96x256xf32, #tpu.memory_space<vmem>>, vector<16x256xf32>
    %c32 = arith.constant 32 : index
    %c0_5 = arith.constant 0 : index
    %4 = vector.load %arg1[%c32, %c0_5] : memref<96x256xf32, #tpu.memory_space<vmem>>, vector<64x256xf32>
    %cst = arith.constant dense<0.000000e+00> : vector<64x256xf32>
    %5 = tpu.matmul %0, %2, %cst {dimension_numbers = #tpu.dot_dimension_numbers<[1], [0], [0], [1], [0, 0, 1, 1], [], []>} : vector<64x16xf32>, vector<16x256xf32>, vector<64x256xf32> -> vector<64x256xf32>
    %cst_6 = arith.constant dense<0.000000e+00> : vector<64x256xf32>
    %6 = tpu.matmul %0, %3, %cst_6 {dimension_numbers = #tpu.dot_dimension_numbers<[1], [0], [0], [1], [0, 0, 1, 1], [], []>} : vector<64x16xf32>, vector<16x256xf32>, vector<64x256xf32> -> vector<64x256xf32>
    %cst_7 = arith.constant 0.000000e+00 : f32
    %7 = vector.broadcast %cst_7 : f32 to vector<8x64xf32>
    %cst_8 = arith.constant 0.000000e+00 : f32
    %8 = vector.broadcast %cst_8 : f32 to vector<8x64xf32>
    %cst_9 = arith.constant dense<0.000000e+00> : vector<8x256xf32>
    %9 = tpu.matmul %7, %4, %cst_9 {dimension_numbers = #tpu.dot_dimension_numbers<[1], [0], [0], [1], [0, 0, 1, 1], [], []>} : vector<8x64xf32>, vector<64x256xf32>, vector<8x256xf32> -> vector<8x256xf32>
    %10 = vector.extract_strided_slice %5 {offsets = [0, 0], sizes = [8, 256], strides = [1, 1]} : vector<64x256xf32> to vector<8x256xf32>
    %11 = arith.addf %9, %10 : vector<8x256xf32>
    %12 = vector.extract_strided_slice %6 {offsets = [56, 0], sizes = [8, 256], strides = [1, 1]} : vector<64x256xf32> to vector<8x256xf32>
    %13 = arith.addf %11, %12 : vector<8x256xf32>
    %14 = vector.extract_strided_slice %13 {offsets = [0, 0], sizes = [8, 64], strides = [1, 1]} : vector<8x256xf32> to vector<8x64xf32>
    %15 = arith.negf %14 : vector<8x64xf32>
    %16 = math.exp %15 : vector<8x64xf32>
    %cst_10 = arith.constant 1.000000e+00 : f32
    %17 = vector.broadcast %cst_10 : f32 to vector<8x64xf32>
    %18 = arith.addf %17, %16 : vector<8x64xf32>
    %19 = arith.divf %17, %18 : vector<8x64xf32>
    %20 = vector.extract_strided_slice %13 {offsets = [0, 64], sizes = [8, 64], strides = [1, 1]} : vector<8x256xf32> to vector<8x64xf32>
    %21 = arith.negf %20 : vector<8x64xf32>
    %22 = math.exp %21 : vector<8x64xf32>
    %cst_11 = arith.constant 1.000000e+00 : f32
    %23 = vector.broadcast %cst_11 : f32 to vector<8x64xf32>
    %24 = arith.addf %23, %22 : vector<8x64xf32>
    %25 = arith.divf %23, %24 : vector<8x64xf32>
    %26 = vector.extract_strided_slice %13 {offsets = [0, 128], sizes = [8, 64], strides = [1, 1]} : vector<8x256xf32> to vector<8x64xf32>
    %27 = math.tanh %26 : vector<8x64xf32>
    %28 = vector.extract_strided_slice %13 {offsets = [0, 192], sizes = [8, 64], strides = [1, 1]} : vector<8x256xf32> to vector<8x64xf32>
    %29 = arith.negf %28 : vector<8x64xf32>
    %30 = math.exp %29 : vector<8x64xf32>
    %cst_12 = arith.constant 1.000000e+00 : f32
    %31 = vector.broadcast %cst_12 : f32 to vector<8x64xf32>
    %32 = arith.addf %31, %30 : vector<8x64xf32>
    %33 = arith.divf %31, %32 : vector<8x64xf32>
    %34 = arith.mulf %25, %8 : vector<8x64xf32>
    %35 = arith.mulf %19, %27 : vector<8x64xf32>
    %36 = arith.addf %34, %35 : vector<8x64xf32>
    %37 = math.tanh %36 : vector<8x64xf32>
    %38 = arith.mulf %33, %37 : vector<8x64xf32>
    %cst_13 = arith.constant dense<0.000000e+00> : vector<8x256xf32>
    %39 = tpu.matmul %38, %4, %cst_13 {dimension_numbers = #tpu.dot_dimension_numbers<[1], [0], [0], [1], [0, 0, 1, 1], [], []>} : vector<8x64xf32>, vector<64x256xf32>, vector<8x256xf32> -> vector<8x256xf32>
    %40 = vector.extract_strided_slice %5 {offsets = [8, 0], sizes = [8, 256], strides = [1, 1]} : vector<64x256xf32> to vector<8x256xf32>
    %41 = arith.addf %39, %40 : vector<8x256xf32>
    %42 = vector.extract_strided_slice %6 {offsets = [48, 0], sizes = [8, 256], strides = [1, 1]} : vector<64x256xf32> to vector<8x256xf32>
    %43 = arith.addf %41, %42 : vector<8x256xf32>
    %44 = vector.extract_strided_slice %43 {offsets = [0, 0], sizes = [8, 64], strides = [1, 1]} : vector<8x256xf32> to vector<8x64xf32>
    %45 = arith.negf %44 : vector<8x64xf32>
    %46 = math.exp %45 : vector<8x64xf32>
    %cst_14 = arith.constant 1.000000e+00 : f32
    %47 = vector.broadcast %cst_14 : f32 to vector<8x64xf32>
    %48 = arith.addf %47, %46 : vector<8x64xf32>
    %49 = arith.divf %47, %48 : vector<8x64xf32>
    %50 = vector.extract_strided_slice %43 {offsets = [0, 64], sizes = [8, 64], strides = [1, 1]} : vector<8x256xf32> to vector<8x64xf32>
    %51 = arith.negf %50 : vector<8x64xf32>
    %52 = math.exp %51 : vector<8x64xf32>
    %cst_15 = arith.constant 1.000000e+00 : f32
    %53 = vector.broadcast %cst_15 : f32 to vector<8x64xf32>
    %54 = arith.addf %53, %52 : vector<8x64xf32>
    %55 = arith.divf %53, %54 : vector<8x64xf32>
    %56 = vector.extract_strided_slice %43 {offsets = [0, 128], sizes = [8, 64], strides = [1, 1]} : vector<8x256xf32> to vector<8x64xf32>
    %57 = math.tanh %56 : vector<8x64xf32>
    %58 = vector.extract_strided_slice %43 {offsets = [0, 192], sizes = [8, 64], strides = [1, 1]} : vector<8x256xf32> to vector<8x64xf32>
    %59 = arith.negf %58 : vector<8x64xf32>
    %60 = math.exp %59 : vector<8x64xf32>
    %cst_16 = arith.constant 1.000000e+00 : f32
    %61 = vector.broadcast %cst_16 : f32 to vector<8x64xf32>
    %62 = arith.addf %61, %60 : vector<8x64xf32>
    %63 = arith.divf %61, %62 : vector<8x64xf32>
    %64 = arith.mulf %55, %36 : vector<8x64xf32>
    %65 = arith.mulf %49, %57 : vector<8x64xf32>
    %66 = arith.addf %64, %65 : vector<8x64xf32>
    %67 = math.tanh %66 : vector<8x64xf32>
    %68 = arith.mulf %63, %67 : vector<8x64xf32>
    %cst_17 = arith.constant dense<0.000000e+00> : vector<8x256xf32>
    %69 = tpu.matmul %68, %4, %cst_17 {dimension_numbers = #tpu.dot_dimension_numbers<[1], [0], [0], [1], [0, 0, 1, 1], [], []>} : vector<8x64xf32>, vector<64x256xf32>, vector<8x256xf32> -> vector<8x256xf32>
    %70 = vector.extract_strided_slice %5 {offsets = [16, 0], sizes = [8, 256], strides = [1, 1]} : vector<64x256xf32> to vector<8x256xf32>
    %71 = arith.addf %69, %70 : vector<8x256xf32>
    %72 = vector.extract_strided_slice %6 {offsets = [40, 0], sizes = [8, 256], strides = [1, 1]} : vector<64x256xf32> to vector<8x256xf32>
    %73 = arith.addf %71, %72 : vector<8x256xf32>
    %74 = vector.extract_strided_slice %73 {offsets = [0, 0], sizes = [8, 64], strides = [1, 1]} : vector<8x256xf32> to vector<8x64xf32>
    %75 = arith.negf %74 : vector<8x64xf32>
    %76 = math.exp %75 : vector<8x64xf32>
    %cst_18 = arith.constant 1.000000e+00 : f32
    %77 = vector.broadcast %cst_18 : f32 to vector<8x64xf32>
    %78 = arith.addf %77, %76 : vector<8x64xf32>
    %79 = arith.divf %77, %78 : vector<8x64xf32>
    %80 = vector.extract_strided_slice %73 {offsets = [0, 64], sizes = [8, 64], strides = [1, 1]} : vector<8x256xf32> to vector<8x64xf32>
    %81 = arith.negf %80 : vector<8x64xf32>
    %82 = math.exp %81 : vector<8x64xf32>
    %cst_19 = arith.constant 1.000000e+00 : f32
    %83 = vector.broadcast %cst_19 : f32 to vector<8x64xf32>
    %84 = arith.addf %83, %82 : vector<8x64xf32>
    %85 = arith.divf %83, %84 : vector<8x64xf32>
    %86 = vector.extract_strided_slice %73 {offsets = [0, 128], sizes = [8, 64], strides = [1, 1]} : vector<8x256xf32> to vector<8x64xf32>
    %87 = math.tanh %86 : vector<8x64xf32>
    %88 = vector.extract_strided_slice %73 {offsets = [0, 192], sizes = [8, 64], strides = [1, 1]} : vector<8x256xf32> to vector<8x64xf32>
    %89 = arith.negf %88 : vector<8x64xf32>
    %90 = math.exp %89 : vector<8x64xf32>
    %cst_20 = arith.constant 1.000000e+00 : f32
    %91 = vector.broadcast %cst_20 : f32 to vector<8x64xf32>
    %92 = arith.addf %91, %90 : vector<8x64xf32>
    %93 = arith.divf %91, %92 : vector<8x64xf32>
    %94 = arith.mulf %85, %66 : vector<8x64xf32>
    %95 = arith.mulf %79, %87 : vector<8x64xf32>
    %96 = arith.addf %94, %95 : vector<8x64xf32>
    %97 = math.tanh %96 : vector<8x64xf32>
    %98 = arith.mulf %93, %97 : vector<8x64xf32>
    %cst_21 = arith.constant dense<0.000000e+00> : vector<8x256xf32>
    %99 = tpu.matmul %98, %4, %cst_21 {dimension_numbers = #tpu.dot_dimension_numbers<[1], [0], [0], [1], [0, 0, 1, 1], [], []>} : vector<8x64xf32>, vector<64x256xf32>, vector<8x256xf32> -> vector<8x256xf32>
    %100 = vector.extract_strided_slice %5 {offsets = [24, 0], sizes = [8, 256], strides = [1, 1]} : vector<64x256xf32> to vector<8x256xf32>
    %101 = arith.addf %99, %100 : vector<8x256xf32>
    %102 = vector.extract_strided_slice %6 {offsets = [32, 0], sizes = [8, 256], strides = [1, 1]} : vector<64x256xf32> to vector<8x256xf32>
    %103 = arith.addf %101, %102 : vector<8x256xf32>
    %104 = vector.extract_strided_slice %103 {offsets = [0, 0], sizes = [8, 64], strides = [1, 1]} : vector<8x256xf32> to vector<8x64xf32>
    %105 = arith.negf %104 : vector<8x64xf32>
    %106 = math.exp %105 : vector<8x64xf32>
    %cst_22 = arith.constant 1.000000e+00 : f32
    %107 = vector.broadcast %cst_22 : f32 to vector<8x64xf32>
    %108 = arith.addf %107, %106 : vector<8x64xf32>
    %109 = arith.divf %107, %108 : vector<8x64xf32>
    %110 = vector.extract_strided_slice %103 {offsets = [0, 64], sizes = [8, 64], strides = [1, 1]} : vector<8x256xf32> to vector<8x64xf32>
    %111 = arith.negf %110 : vector<8x64xf32>
    %112 = math.exp %111 : vector<8x64xf32>
    %cst_23 = arith.constant 1.000000e+00 : f32
    %113 = vector.broadcast %cst_23 : f32 to vector<8x64xf32>
    %114 = arith.addf %113, %112 : vector<8x64xf32>
    %115 = arith.divf %113, %114 : vector<8x64xf32>
    %116 = vector.extract_strided_slice %103 {offsets = [0, 128], sizes = [8, 64], strides = [1, 1]} : vector<8x256xf32> to vector<8x64xf32>
    %117 = math.tanh %116 : vector<8x64xf32>
    %118 = vector.extract_strided_slice %103 {offsets = [0, 192], sizes = [8, 64], strides = [1, 1]} : vector<8x256xf32> to vector<8x64xf32>
    %119 = arith.negf %118 : vector<8x64xf32>
    %120 = math.exp %119 : vector<8x64xf32>
    %cst_24 = arith.constant 1.000000e+00 : f32
    %121 = vector.broadcast %cst_24 : f32 to vector<8x64xf32>
    %122 = arith.addf %121, %120 : vector<8x64xf32>
    %123 = arith.divf %121, %122 : vector<8x64xf32>
    %124 = arith.mulf %115, %96 : vector<8x64xf32>
    %125 = arith.mulf %109, %117 : vector<8x64xf32>
    %126 = arith.addf %124, %125 : vector<8x64xf32>
    %127 = math.tanh %126 : vector<8x64xf32>
    %128 = arith.mulf %123, %127 : vector<8x64xf32>
    %cst_25 = arith.constant dense<0.000000e+00> : vector<8x256xf32>
    %129 = tpu.matmul %128, %4, %cst_25 {dimension_numbers = #tpu.dot_dimension_numbers<[1], [0], [0], [1], [0, 0, 1, 1], [], []>} : vector<8x64xf32>, vector<64x256xf32>, vector<8x256xf32> -> vector<8x256xf32>
    %130 = vector.extract_strided_slice %5 {offsets = [32, 0], sizes = [8, 256], strides = [1, 1]} : vector<64x256xf32> to vector<8x256xf32>
    %131 = arith.addf %129, %130 : vector<8x256xf32>
    %132 = vector.extract_strided_slice %6 {offsets = [24, 0], sizes = [8, 256], strides = [1, 1]} : vector<64x256xf32> to vector<8x256xf32>
    %133 = arith.addf %131, %132 : vector<8x256xf32>
    %134 = vector.extract_strided_slice %133 {offsets = [0, 0], sizes = [8, 64], strides = [1, 1]} : vector<8x256xf32> to vector<8x64xf32>
    %135 = arith.negf %134 : vector<8x64xf32>
    %136 = math.exp %135 : vector<8x64xf32>
    %cst_26 = arith.constant 1.000000e+00 : f32
    %137 = vector.broadcast %cst_26 : f32 to vector<8x64xf32>
    %138 = arith.addf %137, %136 : vector<8x64xf32>
    %139 = arith.divf %137, %138 : vector<8x64xf32>
    %140 = vector.extract_strided_slice %133 {offsets = [0, 64], sizes = [8, 64], strides = [1, 1]} : vector<8x256xf32> to vector<8x64xf32>
    %141 = arith.negf %140 : vector<8x64xf32>
    %142 = math.exp %141 : vector<8x64xf32>
    %cst_27 = arith.constant 1.000000e+00 : f32
    %143 = vector.broadcast %cst_27 : f32 to vector<8x64xf32>
    %144 = arith.addf %143, %142 : vector<8x64xf32>
    %145 = arith.divf %143, %144 : vector<8x64xf32>
    %146 = vector.extract_strided_slice %133 {offsets = [0, 128], sizes = [8, 64], strides = [1, 1]} : vector<8x256xf32> to vector<8x64xf32>
    %147 = math.tanh %146 : vector<8x64xf32>
    %148 = vector.extract_strided_slice %133 {offsets = [0, 192], sizes = [8, 64], strides = [1, 1]} : vector<8x256xf32> to vector<8x64xf32>
    %149 = arith.negf %148 : vector<8x64xf32>
    %150 = math.exp %149 : vector<8x64xf32>
    %cst_28 = arith.constant 1.000000e+00 : f32
    %151 = vector.broadcast %cst_28 : f32 to vector<8x64xf32>
    %152 = arith.addf %151, %150 : vector<8x64xf32>
    %153 = arith.divf %151, %152 : vector<8x64xf32>
    %154 = arith.mulf %145, %126 : vector<8x64xf32>
    %155 = arith.mulf %139, %147 : vector<8x64xf32>
    %156 = arith.addf %154, %155 : vector<8x64xf32>
    %157 = math.tanh %156 : vector<8x64xf32>
    %158 = arith.mulf %153, %157 : vector<8x64xf32>
    %cst_29 = arith.constant dense<0.000000e+00> : vector<8x256xf32>
    %159 = tpu.matmul %158, %4, %cst_29 {dimension_numbers = #tpu.dot_dimension_numbers<[1], [0], [0], [1], [0, 0, 1, 1], [], []>} : vector<8x64xf32>, vector<64x256xf32>, vector<8x256xf32> -> vector<8x256xf32>
    %160 = vector.extract_strided_slice %5 {offsets = [40, 0], sizes = [8, 256], strides = [1, 1]} : vector<64x256xf32> to vector<8x256xf32>
    %161 = arith.addf %159, %160 : vector<8x256xf32>
    %162 = vector.extract_strided_slice %6 {offsets = [16, 0], sizes = [8, 256], strides = [1, 1]} : vector<64x256xf32> to vector<8x256xf32>
    %163 = arith.addf %161, %162 : vector<8x256xf32>
    %164 = vector.extract_strided_slice %163 {offsets = [0, 0], sizes = [8, 64], strides = [1, 1]} : vector<8x256xf32> to vector<8x64xf32>
    %165 = arith.negf %164 : vector<8x64xf32>
    %166 = math.exp %165 : vector<8x64xf32>
    %cst_30 = arith.constant 1.000000e+00 : f32
    %167 = vector.broadcast %cst_30 : f32 to vector<8x64xf32>
    %168 = arith.addf %167, %166 : vector<8x64xf32>
    %169 = arith.divf %167, %168 : vector<8x64xf32>
    %170 = vector.extract_strided_slice %163 {offsets = [0, 64], sizes = [8, 64], strides = [1, 1]} : vector<8x256xf32> to vector<8x64xf32>
    %171 = arith.negf %170 : vector<8x64xf32>
    %172 = math.exp %171 : vector<8x64xf32>
    %cst_31 = arith.constant 1.000000e+00 : f32
    %173 = vector.broadcast %cst_31 : f32 to vector<8x64xf32>
    %174 = arith.addf %173, %172 : vector<8x64xf32>
    %175 = arith.divf %173, %174 : vector<8x64xf32>
    %176 = vector.extract_strided_slice %163 {offsets = [0, 128], sizes = [8, 64], strides = [1, 1]} : vector<8x256xf32> to vector<8x64xf32>
    %177 = math.tanh %176 : vector<8x64xf32>
    %178 = vector.extract_strided_slice %163 {offsets = [0, 192], sizes = [8, 64], strides = [1, 1]} : vector<8x256xf32> to vector<8x64xf32>
    %179 = arith.negf %178 : vector<8x64xf32>
    %180 = math.exp %179 : vector<8x64xf32>
    %cst_32 = arith.constant 1.000000e+00 : f32
    %181 = vector.broadcast %cst_32 : f32 to vector<8x64xf32>
    %182 = arith.addf %181, %180 : vector<8x64xf32>
    %183 = arith.divf %181, %182 : vector<8x64xf32>
    %184 = arith.mulf %175, %156 : vector<8x64xf32>
    %185 = arith.mulf %169, %177 : vector<8x64xf32>
    %186 = arith.addf %184, %185 : vector<8x64xf32>
    %187 = math.tanh %186 : vector<8x64xf32>
    %188 = arith.mulf %183, %187 : vector<8x64xf32>
    %cst_33 = arith.constant dense<0.000000e+00> : vector<8x256xf32>
    %189 = tpu.matmul %188, %4, %cst_33 {dimension_numbers = #tpu.dot_dimension_numbers<[1], [0], [0], [1], [0, 0, 1, 1], [], []>} : vector<8x64xf32>, vector<64x256xf32>, vector<8x256xf32> -> vector<8x256xf32>
    %190 = vector.extract_strided_slice %5 {offsets = [48, 0], sizes = [8, 256], strides = [1, 1]} : vector<64x256xf32> to vector<8x256xf32>
    %191 = arith.addf %189, %190 : vector<8x256xf32>
    %192 = vector.extract_strided_slice %6 {offsets = [8, 0], sizes = [8, 256], strides = [1, 1]} : vector<64x256xf32> to vector<8x256xf32>
    %193 = arith.addf %191, %192 : vector<8x256xf32>
    %194 = vector.extract_strided_slice %193 {offsets = [0, 0], sizes = [8, 64], strides = [1, 1]} : vector<8x256xf32> to vector<8x64xf32>
    %195 = arith.negf %194 : vector<8x64xf32>
    %196 = math.exp %195 : vector<8x64xf32>
    %cst_34 = arith.constant 1.000000e+00 : f32
    %197 = vector.broadcast %cst_34 : f32 to vector<8x64xf32>
    %198 = arith.addf %197, %196 : vector<8x64xf32>
    %199 = arith.divf %197, %198 : vector<8x64xf32>
    %200 = vector.extract_strided_slice %193 {offsets = [0, 64], sizes = [8, 64], strides = [1, 1]} : vector<8x256xf32> to vector<8x64xf32>
    %201 = arith.negf %200 : vector<8x64xf32>
    %202 = math.exp %201 : vector<8x64xf32>
    %cst_35 = arith.constant 1.000000e+00 : f32
    %203 = vector.broadcast %cst_35 : f32 to vector<8x64xf32>
    %204 = arith.addf %203, %202 : vector<8x64xf32>
    %205 = arith.divf %203, %204 : vector<8x64xf32>
    %206 = vector.extract_strided_slice %193 {offsets = [0, 128], sizes = [8, 64], strides = [1, 1]} : vector<8x256xf32> to vector<8x64xf32>
    %207 = math.tanh %206 : vector<8x64xf32>
    %208 = vector.extract_strided_slice %193 {offsets = [0, 192], sizes = [8, 64], strides = [1, 1]} : vector<8x256xf32> to vector<8x64xf32>
    %209 = arith.negf %208 : vector<8x64xf32>
    %210 = math.exp %209 : vector<8x64xf32>
    %cst_36 = arith.constant 1.000000e+00 : f32
    %211 = vector.broadcast %cst_36 : f32 to vector<8x64xf32>
    %212 = arith.addf %211, %210 : vector<8x64xf32>
    %213 = arith.divf %211, %212 : vector<8x64xf32>
    %214 = arith.mulf %205, %186 : vector<8x64xf32>
    %215 = arith.mulf %199, %207 : vector<8x64xf32>
    %216 = arith.addf %214, %215 : vector<8x64xf32>
    %217 = math.tanh %216 : vector<8x64xf32>
    %218 = arith.mulf %213, %217 : vector<8x64xf32>
    %cst_37 = arith.constant dense<0.000000e+00> : vector<8x256xf32>
    %219 = tpu.matmul %218, %4, %cst_37 {dimension_numbers = #tpu.dot_dimension_numbers<[1], [0], [0], [1], [0, 0, 1, 1], [], []>} : vector<8x64xf32>, vector<64x256xf32>, vector<8x256xf32> -> vector<8x256xf32>
    %220 = vector.extract_strided_slice %5 {offsets = [56, 0], sizes = [8, 256], strides = [1, 1]} : vector<64x256xf32> to vector<8x256xf32>
    %221 = arith.addf %219, %220 : vector<8x256xf32>
    %222 = vector.extract_strided_slice %6 {offsets = [0, 0], sizes = [8, 256], strides = [1, 1]} : vector<64x256xf32> to vector<8x256xf32>
    %223 = arith.addf %221, %222 : vector<8x256xf32>
    %224 = vector.extract_strided_slice %223 {offsets = [0, 0], sizes = [8, 64], strides = [1, 1]} : vector<8x256xf32> to vector<8x64xf32>
    %225 = arith.negf %224 : vector<8x64xf32>
    %226 = math.exp %225 : vector<8x64xf32>
    %cst_38 = arith.constant 1.000000e+00 : f32
    %227 = vector.broadcast %cst_38 : f32 to vector<8x64xf32>
    %228 = arith.addf %227, %226 : vector<8x64xf32>
    %229 = arith.divf %227, %228 : vector<8x64xf32>
    %230 = vector.extract_strided_slice %223 {offsets = [0, 64], sizes = [8, 64], strides = [1, 1]} : vector<8x256xf32> to vector<8x64xf32>
    %231 = arith.negf %230 : vector<8x64xf32>
    %232 = math.exp %231 : vector<8x64xf32>
    %cst_39 = arith.constant 1.000000e+00 : f32
    %233 = vector.broadcast %cst_39 : f32 to vector<8x64xf32>
    %234 = arith.addf %233, %232 : vector<8x64xf32>
    %235 = arith.divf %233, %234 : vector<8x64xf32>
    %236 = vector.extract_strided_slice %223 {offsets = [0, 128], sizes = [8, 64], strides = [1, 1]} : vector<8x256xf32> to vector<8x64xf32>
    %237 = math.tanh %236 : vector<8x64xf32>
    %238 = vector.extract_strided_slice %223 {offsets = [0, 192], sizes = [8, 64], strides = [1, 1]} : vector<8x256xf32> to vector<8x64xf32>
    %239 = arith.negf %238 : vector<8x64xf32>
    %240 = math.exp %239 : vector<8x64xf32>
    %cst_40 = arith.constant 1.000000e+00 : f32
    %241 = vector.broadcast %cst_40 : f32 to vector<8x64xf32>
    %242 = arith.addf %241, %240 : vector<8x64xf32>
    %243 = arith.divf %241, %242 : vector<8x64xf32>
    %244 = arith.mulf %235, %216 : vector<8x64xf32>
    %245 = arith.mulf %229, %237 : vector<8x64xf32>
    %246 = arith.addf %244, %245 : vector<8x64xf32>
    %247 = math.tanh %246 : vector<8x64xf32>
    %248 = arith.mulf %243, %247 : vector<8x64xf32>
    %249 = tpu.iota {dimensions = array<i32: 1>} : vector<8x64xi32>
    %c32_i32 = arith.constant 32 : i32
    %250 = vector.broadcast %c32_i32 : i32 to vector<8x64xi32>
    %251 = arith.cmpi slt, %249, %250 : vector<8x64xi32>
    %252 = arith.select %251, %38, %248 : vector<8x64xi1>, vector<8x64xf32>
    %253 = arith.select %251, %68, %218 : vector<8x64xi1>, vector<8x64xf32>
    %254 = arith.select %251, %98, %188 : vector<8x64xi1>, vector<8x64xf32>
    %255 = arith.select %251, %128, %158 : vector<8x64xi1>, vector<8x64xf32>
    %256 = arith.select %251, %158, %128 : vector<8x64xi1>, vector<8x64xf32>
    %257 = arith.select %251, %188, %98 : vector<8x64xi1>, vector<8x64xf32>
    %258 = arith.select %251, %218, %68 : vector<8x64xi1>, vector<8x64xf32>
    %259 = arith.select %251, %248, %38 : vector<8x64xi1>, vector<8x64xf32>
    %260 = tpu.concatenate %252, %253, %254, %255, %256, %257, %258, %259 in 0 : vector<8x64xf32>, vector<8x64xf32>, vector<8x64xf32>, vector<8x64xf32>, vector<8x64xf32>, vector<8x64xf32>, vector<8x64xf32>, vector<8x64xf32> -> vector<64x64xf32>
    %c0_41 = arith.constant 0 : index
    %c0_42 = arith.constant 0 : index
    %261 = vector.load %arg2[%c0_41, %c0_42] : memref<210x16xf32, #tpu.memory_space<vmem>>, vector<64x16xf32>
    %c208 = arith.constant 208 : index
    %c0_43 = arith.constant 0 : index
    %262 = vector.load %arg2[%c208, %c0_43] : memref<210x16xf32, #tpu.memory_space<vmem>>, vector<1x16xf32>
    %cst_44 = arith.constant dense<0.000000e+00> : vector<64x16xf32>
    %263 = tpu.matmul %260, %261, %cst_44 {dimension_numbers = #tpu.dot_dimension_numbers<[1], [0], [0], [1], [0, 0, 1, 1], [], []>} : vector<64x64xf32>, vector<64x16xf32>, vector<64x16xf32> -> vector<64x16xf32>
    %264 = vector.broadcast %262 : vector<1x16xf32> to vector<64x16xf32>
    %265 = arith.addf %263, %264 : vector<64x16xf32>
    %cst_45 = arith.constant dense<0xFF800000> : vector<64xf32>
    %266 = vector.multi_reduction <maximumf>, %265, %cst_45 [1] : vector<64x16xf32> to vector<64xf32>
    %267 = vector.shape_cast %266 : vector<64xf32> to vector<64x1xf32>
    %268 = vector.broadcast %267 : vector<64x1xf32> to vector<64x16xf32>
    %269 = arith.subf %265, %268 : vector<64x16xf32>
    %270 = math.exp %269 : vector<64x16xf32>
    %cst_46 = arith.constant dense<0.000000e+00> : vector<64xf32>
    %271 = vector.multi_reduction <add>, %270, %cst_46 [1] : vector<64x16xf32> to vector<64xf32>
    %272 = vector.shape_cast %271 : vector<64xf32> to vector<64x1xf32>
    %273 = tpu.reciprocal %272 {approx = true} : vector<64x1xf32> -> vector<64x1xf32>
    %274 = vector.broadcast %273 : vector<64x1xf32> to vector<64x16xf32>
    %275 = arith.mulf %270, %274 : vector<64x16xf32>
    %c0_47 = arith.constant 0 : index
    %c0_48 = arith.constant 0 : index
    %276 = vector.load %arg3[%c0_47, %c0_48] : memref<72x16xf32, #tpu.memory_space<vmem>>, vector<64x16xf32>
    tpu.vector_store %arg3[%c0_47, %c0_48], %275 {strides = array<i32>} : memref<72x16xf32, #tpu.memory_space<vmem>>, vector<64x16xf32>,
    %277 = vector.extract_strided_slice %275 {offsets = [0, 0], sizes = [8, 16], strides = [1, 1]} : vector<64x16xf32> to vector<8x16xf32>
    %278 = vector.extract_strided_slice %275 {offsets = [8, 0], sizes = [8, 16], strides = [1, 1]} : vector<64x16xf32> to vector<8x16xf32>
    %279 = vector.extract_strided_slice %275 {offsets = [16, 0], sizes = [8, 16], strides = [1, 1]} : vector<64x16xf32> to vector<8x16xf32>
    %280 = vector.extract_strided_slice %275 {offsets = [24, 0], sizes = [8, 16], strides = [1, 1]} : vector<64x16xf32> to vector<8x16xf32>
    %281 = vector.extract_strided_slice %275 {offsets = [32, 0], sizes = [8, 16], strides = [1, 1]} : vector<64x16xf32> to vector<8x16xf32>
    %282 = vector.extract_strided_slice %275 {offsets = [40, 0], sizes = [8, 16], strides = [1, 1]} : vector<64x16xf32> to vector<8x16xf32>
    %283 = vector.extract_strided_slice %275 {offsets = [48, 0], sizes = [8, 16], strides = [1, 1]} : vector<64x16xf32> to vector<8x16xf32>
    %284 = vector.extract_strided_slice %275 {offsets = [56, 0], sizes = [8, 16], strides = [1, 1]} : vector<64x16xf32> to vector<8x16xf32>
    %285 = tpu.concatenate %277, %278, %279, %280, %281, %282, %283, %284, %1 in 1 : vector<8x16xf32>, vector<8x16xf32>, vector<8x16xf32>, vector<8x16xf32>, vector<8x16xf32>, vector<8x16xf32>, vector<8x16xf32>, vector<8x16xf32>, vector<8x16xf32> -> vector<8x144xf32>
    %c64_49 = arith.constant 64 : index
    %c0_50 = arith.constant 0 : index
    %286 = vector.load %arg2[%c64_49, %c0_50] : memref<210x16xf32, #tpu.memory_space<vmem>>, vector<144x16xf32>
    %c209 = arith.constant 209 : index
    %c0_51 = arith.constant 0 : index
    %287 = vector.load %arg2[%c209, %c0_51] : memref<210x16xf32, #tpu.memory_space<vmem>>, vector<1x16xf32>
    %cst_52 = arith.constant dense<0.000000e+00> : vector<8x16xf32>
    %288 = tpu.matmul %285, %286, %cst_52 {dimension_numbers = #tpu.dot_dimension_numbers<[1], [0], [0], [1], [0, 0, 1, 1], [], []>} : vector<8x144xf32>, vector<144x16xf32>, vector<8x16xf32> -> vector<8x16xf32>
    %289 = vector.broadcast %287 : vector<1x16xf32> to vector<8x16xf32>
    %290 = arith.addf %288, %289 : vector<8x16xf32>
    %c64_53 = arith.constant 64 : index
    %c0_54 = arith.constant 0 : index
    %291 = vector.load %arg3[%c64_53, %c0_54] : memref<72x16xf32, #tpu.memory_space<vmem>>, vector<8x16xf32>
    tpu.vector_store %arg3[%c64_53, %c0_54], %290 {strides = array<i32>} : memref<72x16xf32, #tpu.memory_space<vmem>>, vector<8x16xf32>,
    return
  }
}

</mosaic_0001>

<llo_original>
// kernel: filler_tpe_forward.1
$region0: #{filler_tpe_forward.1}
  #allocation0 [shape = 'u32[]', space=smem, size = 0x4, offset = 0x4, fixed_abs, tag = 'smem constant byte address 0x4 - core index']
  #allocation1 [shape = 'u32[72,128]{1,0:T(1,128)}', space=vmem, size = 0x9000, scoped, tag = 'internal scratch']
  %s0 = inlined_call_operand.vmem [shape: f32[72,16], index: 0, kind: input, shape index: {}]
  %s1 = inlined_call_operand.vmem [shape: f32[96,256], index: 1, kind: input, shape index: {}]
  %s2 = inlined_call_operand.vmem [shape: f32[210,16], index: 2, kind: input, shape index: {}]
  %s3 = inlined_call_operand.vmem [shape: f32[72,16], index: 3, kind: output, shape index: {}]
  %s4 = sld [smem:[#allocation0]]
  $region22: #{filler_tpe_forward.1} parent=0
    _
  %s6 = ssub.s32 1, %s4
  %s7 = scalar_select 0, %s6, %s4
  // Predicated region
  $region2: #{filler_tpe_forward.1} parent=0 // pred_check
    _
  $region3: #{filler_tpe_forward.1} parent=0 // pred_check_branch
    %9 = sbr.rel (0) target = $region5
  $region4: #{filler_tpe_forward.1} parent=0 // pred_region
    _
  $region5: #{filler_tpe_forward.1} parent=0 // pred_fallthru
    _
  // Predicated region
  $region6: #{filler_tpe_forward.1} parent=0 // pred_check
    _
  $region7: #{filler_tpe_forward.1} parent=0 // pred_check_branch
    %11 = sbr.rel (0) target = $region9
  $region8: #{filler_tpe_forward.1} parent=0 // pred_region
    _
  $region9: #{filler_tpe_forward.1} parent=0 // pred_fallthru
    _
  // Predicated region
  $region10: #{filler_tpe_forward.1} parent=0 // pred_check
    _
  $region11: #{filler_tpe_forward.1} parent=0 // pred_check_branch
    %13 = sbr.rel (0) target = $region13
  $region12: #{filler_tpe_forward.1} parent=0 // pred_region
    _
  $region13: #{filler_tpe_forward.1} parent=0 // pred_fallthru
    _
  %v14 = vld [vmem:[%s0] sm:$0xff]
  %v15 = vld [vmem:[%s0 + $0x8] sm:$0xff]
  %v16 = vld [vmem:[%s0 + $0x10] sm:$0xff]
  %v17 = vld [vmem:[%s0 + $0x18] sm:$0xff]
  %v18 = vld [vmem:[%s0 + $0x20] sm:$0xff]
  %v19 = vld [vmem:[%s0 + $0x28] sm:$0xff]
  %v20 = vld [vmem:[%s0 + $0x30] sm:$0xff]
  %v21 = vld [vmem:[%s0 + $0x38] sm:$0xff]
  %v22 = vld [vmem:[%s0 + $0x40] sm:$0xff]
  %v23 = vld [vmem:[%s1] sm:$0xff]
  %v24 = vld [vmem:[%s1 + $0x8] sm:$0xff]
  %v25 = vld [vmem:[%s1 + $0x10] sm:$0xff]
  %v26 = vld [vmem:[%s1 + $0x18] sm:$0xff]
  %v27 = vld [vmem:[%s1 + $0x20] sm:$0xff]
  %v28 = vld [vmem:[%s1 + $0x28] sm:$0xff]
  %v29 = vld [vmem:[%s1 + $0x30] sm:$0xff]
  %v30 = vld [vmem:[%s1 + $0x38] sm:$0xff]
  %v31 = vld [vmem:[%s1 + $0x40] sm:$0xff]
  %v32 = vld [vmem:[%s1 + $0x48] sm:$0xff]
  %v33 = vld [vmem:[%s1 + $0x50] sm:$0xff]
  %v34 = vld [vmem:[%s1 + $0x58] sm:$0xff]
  %v35 = vld [vmem:[%s1 + $0x60] sm:$0xff]
  %v36 = vld [vmem:[%s1 + $0x68] sm:$0xff]
  %v37 = vld [vmem:[%s1 + $0x70] sm:$0xff]
  %v38 = vld [vmem:[%s1 + $0x78] sm:$0xff]
  %v39 = vld [vmem:[%s1 + $0x80] sm:$0xff]
  %v40 = vld [vmem:[%s1 + $0x88] sm:$0xff]
  %v41 = vld [vmem:[%s1 + $0x90] sm:$0xff]
  %v42 = vld [vmem:[%s1 + $0x98] sm:$0xff]
  %v43 = vld [vmem:[%s1 + $0xa0] sm:$0xff]
  %v44 = vld [vmem:[%s1 + $0xa8] sm:$0xff]
  %v45 = vld [vmem:[%s1 + $0xb0] sm:$0xff]
  %v46 = vld [vmem:[%s1 + $0xb8] sm:$0xff]
  %vm47 = vcmask 130048
  %v49 = vsel %vm47, %v14, 0
  %v52 = vsel %vm47, %v15, 0
  %v55 = vsel %vm47, %v16, 0
  %v58 = vsel %vm47, %v17, 0
  %v61 = vsel %vm47, %v18, 0
  %v64 = vsel %vm47, %v19, 0
  %v67 = vsel %vm47, %v20, 0
  %v70 = vsel %vm47, %v21, 0
  %72 = vmatpush.msra.mxu0 0.0
  %73 = vmatpush.msra.mxu0 0.0
  %74 = vmatpush.msra.mxu0 0.0
  %75 = vmatpush.msra.mxu0 0.0
  %76 = vmatpush.msra.mxu0 0.0
  %77 = vmatpush.msra.mxu0 0.0
  %78 = vmatpush.msra.mxu0 0.0
  %79 = vmatpush.msra.mxu0 0.0
  %80 = vmatpush.msra.mxu0 0.0
  %81 = vmatpush.msra.mxu0 0.0
  %82 = vmatpush.msra.mxu0 0.0
  %83 = vmatpush.msra.mxu0 0.0
  %84 = vmatpush.msra.mxu0 0.0
  %85 = vmatpush.msra.mxu0 0.0
  %86 = vmatpush.msra.mxu0 %v25
  %87 = vmatpush.msra.mxu0 %v23
  %88 = vmatmul.f32.gmra.mxu0 %v49
  %v89 = vpop.f32.mrf.mxu0
  %v90 = vadd.f32 0.0, %v89
  %91 = vmatmul.f32.gmra.mxu0 %v52
  %v92 = vpop.f32.mrf.mxu0
  %v93 = vadd.f32 0.0, %v92
  %94 = vmatmul.f32.gmra.mxu0 %v55
  %v95 = vpop.f32.mrf.mxu0
  %v96 = vadd.f32 0.0, %v95
  %97 = vmatmul.f32.gmra.mxu0 %v58
  %v98 = vpop.f32.mrf.mxu0
  %v99 = vadd.f32 0.0, %v98
  %100 = vmatmul.f32.gmra.mxu0 %v61
  %v101 = vpop.f32.mrf.mxu0
  %v102 = vadd.f32 0.0, %v101
  %103 = vmatmul.f32.gmra.mxu0 %v64
  %v104 = vpop.f32.mrf.mxu0
  %v105 = vadd.f32 0.0, %v104
  %106 = vmatmul.f32.gmra.mxu0 %v67
  %v107 = vpop.f32.mrf.mxu0
  %v108 = vadd.f32 0.0, %v107
  %109 = vmatmul.f32.gmra.mxu0 %v70
  %v110 = vpop.f32.mrf.mxu0
  %v111 = vadd.f32 0.0, %v110
  %112 = vdwg.mxu0
  %113 = vmatpush.msra.mxu0 0.0
  %114 = vmatpush.msra.mxu0 0.0
  %115 = vmatpush.msra.mxu0 0.0
  %116 = vmatpush.msra.mxu0 0.0
  %117 = vmatpush.msra.mxu0 0.0
  %118 = vmatpush.msra.mxu0 0.0
  %119 = vmatpush.msra.mxu0 0.0
  %120 = vmatpush.msra.mxu0 0.0
  %121 = vmatpush.msra.mxu0 0.0
  %122 = vmatpush.msra.mxu0 0.0
  %123 = vmatpush.msra.mxu0 0.0
  %124 = vmatpush.msra.mxu0 0.0
  %125 = vmatpush.msra.mxu0 0.0
  %126 = vmatpush.msra.mxu0 0.0
  %127 = vmatpush.msra.mxu0 %v26
  %128 = vmatpush.msra.mxu0 %v24
  %129 = vmatmul.f32.gmra.mxu0 %v49
  %v130 = vpop.f32.mrf.mxu0
  %v131 = vadd.f32 0.0, %v130
  %132 = vmatmul.f32.gmra.mxu0 %v52
  %v133 = vpop.f32.mrf.mxu0
  %v134 = vadd.f32 0.0, %v133
  %135 = vmatmul.f32.gmra.mxu0 %v55
  %v136 = vpop.f32.mrf.mxu0
  %v137 = vadd.f32 0.0, %v136
  %138 = vmatmul.f32.gmra.mxu0 %v58
  %v139 = vpop.f32.mrf.mxu0
  %v140 = vadd.f32 0.0, %v139
  %141 = vmatmul.f32.gmra.mxu0 %v61
  %v142 = vpop.f32.mrf.mxu0
  %v143 = vadd.f32 0.0, %v142
  %144 = vmatmul.f32.gmra.mxu0 %v64
  %v145 = vpop.f32.mrf.mxu0
  %v146 = vadd.f32 0.0, %v145
  %147 = vmatmul.f32.gmra.mxu0 %v67
  %v148 = vpop.f32.mrf.mxu0
  %v149 = vadd.f32 0.0, %v148
  %150 = vmatmul.f32.gmra.mxu0 %v70
  %v151 = vpop.f32.mrf.mxu0
  %v152 = vadd.f32 0.0, %v151
  %153 = vdwg.mxu0
  %154 = vmatpush.msra.mxu0 0.0
  %155 = vmatpush.msra.mxu0 0.0
  %156 = vmatpush.msra.mxu0 0.0
  %157 = vmatpush.msra.mxu0 0.0
  %158 = vmatpush.msra.mxu0 0.0
  %159 = vmatpush.msra.mxu0 0.0
  %160 = vmatpush.msra.mxu0 0.0
  %161 = vmatpush.msra.mxu0 0.0
  %162 = vmatpush.msra.mxu0 0.0
  %163 = vmatpush.msra.mxu0 0.0
  %164 = vmatpush.msra.mxu0 0.0
  %165 = vmatpush.msra.mxu0 0.0
  %166 = vmatpush.msra.mxu0 0.0
  %167 = vmatpush.msra.mxu0 0.0
  %168 = vmatpush.msra.mxu0 %v29
  %169 = vmatpush.msra.mxu0 %v27
  %170 = vmatmul.f32.gmra.mxu0 %v49
  %v171 = vpop.f32.mrf.mxu0
  %v172 = vadd.f32 0.0, %v171
  %173 = vmatmul.f32.gmra.mxu0 %v52
  %v174 = vpop.f32.mrf.mxu0
  %v175 = vadd.f32 0.0, %v174
  %176 = vmatmul.f32.gmra.mxu0 %v55
  %v177 = vpop.f32.mrf.mxu0
  %v178 = vadd.f32 0.0, %v177
  %179 = vmatmul.f32.gmra.mxu0 %v58
  %v180 = vpop.f32.mrf.mxu0
  %v181 = vadd.f32 0.0, %v180
  %182 = vmatmul.f32.gmra.mxu0 %v61
  %v183 = vpop.f32.mrf.mxu0
  %v184 = vadd.f32 0.0, %v183
  %185 = vmatmul.f32.gmra.mxu0 %v64
  %v186 = vpop.f32.mrf.mxu0
  %v187 = vadd.f32 0.0, %v186
  %188 = vmatmul.f32.gmra.mxu0 %v67
  %v189 = vpop.f32.mrf.mxu0
  %v190 = vadd.f32 0.0, %v189
  %191 = vmatmul.f32.gmra.mxu0 %v70
  %v192 = vpop.f32.mrf.mxu0
  %v193 = vadd.f32 0.0, %v192
  %194 = vdwg.mxu0
  %195 = vmatpush.msra.mxu0 0.0
  %196 = vmatpush.msra.mxu0 0.0
  %197 = vmatpush.msra.mxu0 0.0
  %198 = vmatpush.msra.mxu0 0.0
  %199 = vmatpush.msra.mxu0 0.0
  %200 = vmatpush.msra.mxu0 0.0
  %201 = vmatpush.msra.mxu0 0.0
  %202 = vmatpush.msra.mxu0 0.0
  %203 = vmatpush.msra.mxu0 0.0
  %204 = vmatpush.msra.mxu0 0.0
  %205 = vmatpush.msra.mxu0 0.0
  %206 = vmatpush.msra.mxu0 0.0
  %207 = vmatpush.msra.mxu0 0.0
  %208 = vmatpush.msra.mxu0 0.0
  %209 = vmatpush.msra.mxu0 %v30
  %210 = vmatpush.msra.mxu0 %v28
  %211 = vmatmul.f32.gmra.mxu0 %v49
  %v212 = vpop.f32.mrf.mxu0
  %v213 = vadd.f32 0.0, %v212
  %214 = vmatmul.f32.gmra.mxu0 %v52
  %v215 = vpop.f32.mrf.mxu0
  %v216 = vadd.f32 0.0, %v215
  %217 = vmatmul.f32.gmra.mxu0 %v55
  %v218 = vpop.f32.mrf.mxu0
  %v219 = vadd.f32 0.0, %v218
  %220 = vmatmul.f32.gmra.mxu0 %v58
  %v221 = vpop.f32.mrf.mxu0
  %v222 = vadd.f32 0.0, %v221
  %223 = vmatmul.f32.gmra.mxu0 %v61
  %v224 = vpop.f32.mrf.mxu0
  %v225 = vadd.f32 0.0, %v224
  %226 = vmatmul.f32.gmra.mxu0 %v64
  %v227 = vpop.f32.mrf.mxu0
  %v228 = vadd.f32 0.0, %v227
  %229 = vmatmul.f32.gmra.mxu0 %v67
  %v230 = vpop.f32.mrf.mxu0
  %v231 = vadd.f32 0.0, %v230
  %232 = vmatmul.f32.gmra.mxu0 %v70
  %v233 = vpop.f32.mrf.mxu0
  %v234 = vadd.f32 0.0, %v233
  %235 = vdwg.mxu0
  %vm236 = vcmask 523264
  %v238 = vsel %vm236, 0.0, 0
  %240 = vmatpush.msra.mxu0 0.0
  %241 = vmatpush.msra.mxu0 0.0
  %242 = vmatpush.msra.mxu0 0.0
  %243 = vmatpush.msra.mxu0 0.0
  %244 = vmatpush.msra.mxu0 0.0
  %245 = vmatpush.msra.mxu0 0.0
  %246 = vmatpush.msra.mxu0 0.0
  %247 = vmatpush.msra.mxu0 0.0
  %248 = vmatpush.msra.mxu0 %v45
  %249 = vmatpush.msra.mxu0 %v43
  %250 = vmatpush.msra.mxu0 %v41
  %251 = vmatpush.msra.mxu0 %v39
  %252 = vmatpush.msra.mxu0 %v37
  %253 = vmatpush.msra.mxu0 %v35
  %254 = vmatpush.msra.mxu0 %v33
  %255 = vmatpush.msra.mxu0 %v31
  %256 = vmatmul.f32.gmra.mxu0 %v238
  %v257 = vpop.f32.mrf.mxu0
  %v258 = vadd.f32 %v90, %v257
  %259 = vdwg.mxu0
  %260 = vmatpush.msra.mxu0 0.0
  %261 = vmatpush.msra.mxu0 0.0
  %262 = vmatpush.msra.mxu0 0.0
  %263 = vmatpush.msra.mxu0 0.0
  %264 = vmatpush.msra.mxu0 0.0
  %265 = vmatpush.msra.mxu0 0.0
  %266 = vmatpush.msra.mxu0 0.0
  %267 = vmatpush.msra.mxu0 0.0
  %268 = vmatpush.msra.mxu0 %v46
  %269 = vmatpush.msra.mxu0 %v44
  %270 = vmatpush.msra.mxu0 %v42
  %271 = vmatpush.msra.mxu0 %v40
  %272 = vmatpush.msra.mxu0 %v38
  %273 = vmatpush.msra.mxu0 %v36
  %274 = vmatpush.msra.mxu0 %v34
  %275 = vmatpush.msra.mxu0 %v32
  %276 = vmatmul.f32.gmra.mxu0 %v238
  %v277 = vpop.f32.mrf.mxu0
  %v278 = vadd.f32 %v131, %v277
  %279 = vdwg.mxu0
  %v280 = vadd.f32 %v258, %v193
  %v281 = vadd.f32 %v278, %v234
  %v282 = vxor.u32 %v280, 2147483648
  %v283 = vmul.f32 %v282, 1.442695
  %v284 = vpow.pop %v283
  %v285 = vadd.f32 %v284, 1.0
  %v286 = vrcp.pop %v285
  %v287 = vmul.f32 %v285, %v286
  %v288 = vsub.f32 1.0, %v287
  %v289 = vmul.f32 %v286, %v288
  %v290 = vadd.f32 %v286, %v289
  %vm291 = vweird.f32 %v285
  %vm292 = vweird.f32 %v286
  %vm293 = vmor %vm291, %vm292
  %v294 = vsel %vm293, %v286, %v290
  %v295 = vand.u32 2147483647, %v285
  %vm296 = vcmp.eq.f32.partialorder %v295, 8.507059e+37
  %v297 = vand.u32 %v285, 2147483648
  %v298 = vor.u32 1.1754944e-38, %v297
  %v299 = vsel %vm296, %v298, %v294
  %v300 = vmul.f32 1.0, %v299
  %v301 = vtanh.pop %v281
  %v302 = vxor.u32 %v281, 2147483648
  %v303 = vmul.f32 %v302, 1.442695
  %v304 = vpow.pop %v303
  %v305 = vadd.f32 %v304, 1.0
  %v306 = vrcp.pop %v305
  %v307 = vmul.f32 %v305, %v306
  %v308 = vsub.f32 1.0, %v307
  %v309 = vmul.f32 %v306, %v308
  %v310 = vadd.f32 %v306, %v309
  %vm311 = vweird.f32 %v305
  %vm312 = vweird.f32 %v306
  %vm313 = vmor %vm311, %vm312
  %v314 = vsel %vm313, %v306, %v310
  %v315 = vand.u32 2147483647, %v305
  %vm316 = vcmp.eq.f32.partialorder %v315, 8.507059e+37
  %v317 = vand.u32 %v305, 2147483648
  %v318 = vor.u32 1.1754944e-38, %v317
  %v319 = vsel %vm316, %v318, %v314
  %v320 = vmul.f32 1.0, %v319
  %v321 = vmul.f32 %v300, 0.0
  %v322 = vmul.f32 %v300, %v301
  %324 = vrot.lane.b32.xlu0 %v322, 64
  %v325 = vpop.permute.xlu0 %324
  %v327 = vadd.f32 %v321, %v325
  %v328 = vtanh.pop %v327
  %v329 = vmul.f32 %v320, %v328
  %331 = vrot.lane.b32.xlu0 %v329, 64
  %v332 = vpop.permute.xlu0 %331
  %v333 = vsel %vm236, %v332, 0
  %335 = vmatpush.msra.mxu0 0.0
  %336 = vmatpush.msra.mxu0 0.0
  %337 = vmatpush.msra.mxu0 0.0
  %338 = vmatpush.msra.mxu0 0.0
  %339 = vmatpush.msra.mxu0 0.0
  %340 = vmatpush.msra.mxu0 0.0
  %341 = vmatpush.msra.mxu0 0.0
  %342 = vmatpush.msra.mxu0 0.0
  %343 = vmatpush.msra.mxu0 %v45
  %344 = vmatpush.msra.mxu0 %v43
  %345 = vmatpush.msra.mxu0 %v41
  %346 = vmatpush.msra.mxu0 %v39
  %347 = vmatpush.msra.mxu0 %v37
  %348 = vmatpush.msra.mxu0 %v35
  %349 = vmatpush.msra.mxu0 %v33
  %350 = vmatpush.msra.mxu0 %v31
  %351 = vmatmul.f32.gmra.mxu0 %v333
  %v352 = vpop.f32.mrf.mxu0
  %v353 = vadd.f32 %v93, %v352
  %354 = vdwg.mxu0
  %355 = vmatpush.msra.mxu0 0.0
  %356 = vmatpush.msra.mxu0 0.0
  %357 = vmatpush.msra.mxu0 0.0
  %358 = vmatpush.msra.mxu0 0.0
  %359 = vmatpush.msra.mxu0 0.0
  %360 = vmatpush.msra.mxu0 0.0
  %361 = vmatpush.msra.mxu0 0.0
  %362 = vmatpush.msra.mxu0 0.0
  %363 = vmatpush.msra.mxu0 %v46
  %364 = vmatpush.msra.mxu0 %v44
  %365 = vmatpush.msra.mxu0 %v42
  %366 = vmatpush.msra.mxu0 %v40
  %367 = vmatpush.msra.mxu0 %v38
  %368 = vmatpush.msra.mxu0 %v36
  %369 = vmatpush.msra.mxu0 %v34
  %370 = vmatpush.msra.mxu0 %v32
  %371 = vmatmul.f32.gmra.mxu0 %v333
  %v372 = vpop.f32.mrf.mxu0
  %v373 = vadd.f32 %v134, %v372
  %374 = vdwg.mxu0
  %v375 = vadd.f32 %v353, %v190
  %v376 = vadd.f32 %v373, %v231
  %v377 = vxor.u32 %v375, 2147483648
  %v378 = vmul.f32 %v377, 1.442695
  %v379 = vpow.pop %v378
  %v380 = vadd.f32 %v379, 1.0
  %v381 = vrcp.pop %v380
  %v382 = vmul.f32 %v380, %v381
  %v383 = vsub.f32 1.0, %v382
  %v384 = vmul.f32 %v381, %v383
  %v385 = vadd.f32 %v381, %v384
  %vm386 = vweird.f32 %v380
  %vm387 = vweird.f32 %v381
  %vm388 = vmor %vm386, %vm387
  %v389 = vsel %vm388, %v381, %v385
  %v390 = vand.u32 2147483647, %v380
  %vm391 = vcmp.eq.f32.partialorder %v390, 8.507059e+37
  %v392 = vand.u32 %v380, 2147483648
  %v393 = vor.u32 1.1754944e-38, %v392
  %v394 = vsel %vm391, %v393, %v389
  %v395 = vmul.f32 1.0, %v394
  %v396 = vtanh.pop %v376
  %v397 = vxor.u32 %v376, 2147483648
  %v398 = vmul.f32 %v397, 1.442695
  %v399 = vpow.pop %v398
  %v400 = vadd.f32 %v399, 1.0
  %v401 = vrcp.pop %v400
  %v402 = vmul.f32 %v400, %v401
  %v403 = vsub.f32 1.0, %v402
  %v404 = vmul.f32 %v401, %v403
  %v405 = vadd.f32 %v401, %v404
  %vm406 = vweird.f32 %v400
  %vm407 = vweird.f32 %v401
  %vm408 = vmor %vm406, %vm407
  %v409 = vsel %vm408, %v401, %v405
  %v410 = vand.u32 2147483647, %v400
  %vm411 = vcmp.eq.f32.partialorder %v410, 8.507059e+37
  %v412 = vand.u32 %v400, 2147483648
  %v413 = vor.u32 1.1754944e-38, %v412
  %v414 = vsel %vm411, %v413, %v409
  %v415 = vmul.f32 1.0, %v414
  %v416 = vmul.f32 %v395, %v327
  %v417 = vmul.f32 %v395, %v396
  %419 = vrot.lane.b32.xlu0 %v417, 64
  %v420 = vpop.permute.xlu0 %419
  %v422 = vadd.f32 %v416, %v420
  %v423 = vtanh.pop %v422
  %v424 = vmul.f32 %v415, %v423
  %426 = vrot.lane.b32.xlu0 %v424, 64
  %v427 = vpop.permute.xlu0 %426
  %v428 = vsel %vm236, %v427, 0
  %430 = vmatpush.msra.mxu0 0.0
  %431 = vmatpush.msra.mxu0 0.0
  %432 = vmatpush.msra.mxu0 0.0
  %433 = vmatpush.msra.mxu0 0.0
  %434 = vmatpush.msra.mxu0 0.0
  %435 = vmatpush.msra.mxu0 0.0
  %436 = vmatpush.msra.mxu0 0.0
  %437 = vmatpush.msra.mxu0 0.0
  %438 = vmatpush.msra.mxu0 %v45
  %439 = vmatpush.msra.mxu0 %v43
  %440 = vmatpush.msra.mxu0 %v41
  %441 = vmatpush.msra.mxu0 %v39
  %442 = vmatpush.msra.mxu0 %v37
  %443 = vmatpush.msra.mxu0 %v35
  %444 = vmatpush.msra.mxu0 %v33
  %445 = vmatpush.msra.mxu0 %v31
  %446 = vmatmul.f32.gmra.mxu0 %v428
  %v447 = vpop.f32.mrf.mxu0
  %v448 = vadd.f32 %v96, %v447
  %449 = vdwg.mxu0
  %450 = vmatpush.msra.mxu0 0.0
  %451 = vmatpush.msra.mxu0 0.0
  %452 = vmatpush.msra.mxu0 0.0
  %453 = vmatpush.msra.mxu0 0.0
  %454 = vmatpush.msra.mxu0 0.0
  %455 = vmatpush.msra.mxu0 0.0
  %456 = vmatpush.msra.mxu0 0.0
  %457 = vmatpush.msra.mxu0 0.0
  %458 = vmatpush.msra.mxu0 %v46
  %459 = vmatpush.msra.mxu0 %v44
  %460 = vmatpush.msra.mxu0 %v42
  %461 = vmatpush.msra.mxu0 %v40
  %462 = vmatpush.msra.mxu0 %v38
  %463 = vmatpush.msra.mxu0 %v36
  %464 = vmatpush.msra.mxu0 %v34
  %465 = vmatpush.msra.mxu0 %v32
  %466 = vmatmul.f32.gmra.mxu0 %v428
  %v467 = vpop.f32.mrf.mxu0
  %v468 = vadd.f32 %v137, %v467
  %469 = vdwg.mxu0
  %v470 = vadd.f32 %v448, %v187
  %v471 = vadd.f32 %v468, %v228
  %v472 = vxor.u32 %v470, 2147483648
  %v473 = vmul.f32 %v472, 1.442695
  %v474 = vpow.pop %v473
  %v475 = vadd.f32 %v474, 1.0
  %v476 = vrcp.pop %v475
  %v477 = vmul.f32 %v475, %v476
  %v478 = vsub.f32 1.0, %v477
  %v479 = vmul.f32 %v476, %v478
  %v480 = vadd.f32 %v476, %v479
  %vm481 = vweird.f32 %v475
  %vm482 = vweird.f32 %v476
  %vm483 = vmor %vm481, %vm482
  %v484 = vsel %vm483, %v476, %v480
  %v485 = vand.u32 2147483647, %v475
  %vm486 = vcmp.eq.f32.partialorder %v485, 8.507059e+37
  %v487 = vand.u32 %v475, 2147483648
  %v488 = vor.u32 1.1754944e-38, %v487
  %v489 = vsel %vm486, %v488, %v484
  %v490 = vmul.f32 1.0, %v489
  %v491 = vtanh.pop %v471
  %v492 = vxor.u32 %v471, 2147483648
  %v493 = vmul.f32 %v492, 1.442695
  %v494 = vpow.pop %v493
  %v495 = vadd.f32 %v494, 1.0
  %v496 = vrcp.pop %v495
  %v497 = vmul.f32 %v495, %v496
  %v498 = vsub.f32 1.0, %v497
  %v499 = vmul.f32 %v496, %v498
  %v500 = vadd.f32 %v496, %v499
  %vm501 = vweird.f32 %v495
  %vm502 = vweird.f32 %v496
  %vm503 = vmor %vm501, %vm502
  %v504 = vsel %vm503, %v496, %v500
  %v505 = vand.u32 2147483647, %v495
  %vm506 = vcmp.eq.f32.partialorder %v505, 8.507059e+37
  %v507 = vand.u32 %v495, 2147483648
  %v508 = vor.u32 1.1754944e-38, %v507
  %v509 = vsel %vm506, %v508, %v504
  %v510 = vmul.f32 1.0, %v509
  %v511 = vmul.f32 %v490, %v422
  %v512 = vmul.f32 %v490, %v491
  %514 = vrot.lane.b32.xlu0 %v512, 64
  %v515 = vpop.permute.xlu0 %514
  %v517 = vadd.f32 %v511, %v515
  %v518 = vtanh.pop %v517
  %v519 = vmul.f32 %v510, %v518
  %521 = vrot.lane.b32.xlu0 %v519, 64
  %v522 = vpop.permute.xlu0 %521
  %v523 = vsel %vm236, %v522, 0
  %525 = vmatpush.msra.mxu0 0.0
  %526 = vmatpush.msra.mxu0 0.0
  %527 = vmatpush.msra.mxu0 0.0
  %528 = vmatpush.msra.mxu0 0.0
  %529 = vmatpush.msra.mxu0 0.0
  %530 = vmatpush.msra.mxu0 0.0
  %531 = vmatpush.msra.mxu0 0.0
  %532 = vmatpush.msra.mxu0 0.0
  %533 = vmatpush.msra.mxu0 %v45
  %534 = vmatpush.msra.mxu0 %v43
  %535 = vmatpush.msra.mxu0 %v41
  %536 = vmatpush.msra.mxu0 %v39
  %537 = vmatpush.msra.mxu0 %v37
  %538 = vmatpush.msra.mxu0 %v35
  %539 = vmatpush.msra.mxu0 %v33
  %540 = vmatpush.msra.mxu0 %v31
  %541 = vmatmul.f32.gmra.mxu0 %v523
  %v542 = vpop.f32.mrf.mxu0
  %v543 = vadd.f32 %v99, %v542
  %544 = vdwg.mxu0
  %545 = vmatpush.msra.mxu0 0.0
  %546 = vmatpush.msra.mxu0 0.0
  %547 = vmatpush.msra.mxu0 0.0
  %548 = vmatpush.msra.mxu0 0.0
  %549 = vmatpush.msra.mxu0 0.0
  %550 = vmatpush.msra.mxu0 0.0
  %551 = vmatpush.msra.mxu0 0.0
  %552 = vmatpush.msra.mxu0 0.0
  %553 = vmatpush.msra.mxu0 %v46
  %554 = vmatpush.msra.mxu0 %v44
  %555 = vmatpush.msra.mxu0 %v42
  %556 = vmatpush.msra.mxu0 %v40
  %557 = vmatpush.msra.mxu0 %v38
  %558 = vmatpush.msra.mxu0 %v36
  %559 = vmatpush.msra.mxu0 %v34
  %560 = vmatpush.msra.mxu0 %v32
  %561 = vmatmul.f32.gmra.mxu0 %v523
  %v562 = vpop.f32.mrf.mxu0
  %v563 = vadd.f32 %v140, %v562
  %564 = vdwg.mxu0
  %v565 = vadd.f32 %v543, %v184
  %v566 = vadd.f32 %v563, %v225
  %v567 = vxor.u32 %v565, 2147483648
  %v568 = vmul.f32 %v567, 1.442695
  %v569 = vpow.pop %v568
  %v570 = vadd.f32 %v569, 1.0
  %v571 = vrcp.pop %v570
  %v572 = vmul.f32 %v570, %v571
  %v573 = vsub.f32 1.0, %v572
  %v574 = vmul.f32 %v571, %v573
  %v575 = vadd.f32 %v571, %v574
  %vm576 = vweird.f32 %v570
  %vm577 = vweird.f32 %v571
  %vm578 = vmor %vm576, %vm577
  %v579 = vsel %vm578, %v571, %v575
  %v580 = vand.u32 2147483647, %v570
  %vm581 = vcmp.eq.f32.partialorder %v580, 8.507059e+37
  %v582 = vand.u32 %v570, 2147483648
  %v583 = vor.u32 1.1754944e-38, %v582
  %v584 = vsel %vm581, %v583, %v579
  %v585 = vmul.f32 1.0, %v584
  %v586 = vtanh.pop %v566
  %v587 = vxor.u32 %v566, 2147483648
  %v588 = vmul.f32 %v587, 1.442695
  %v589 = vpow.pop %v588
  %v590 = vadd.f32 %v589, 1.0
  %v591 = vrcp.pop %v590
  %v592 = vmul.f32 %v590, %v591
  %v593 = vsub.f32 1.0, %v592
  %v594 = vmul.f32 %v591, %v593
  %v595 = vadd.f32 %v591, %v594
  %vm596 = vweird.f32 %v590
  %vm597 = vweird.f32 %v591
  %vm598 = vmor %vm596, %vm597
  %v599 = vsel %vm598, %v591, %v595
  %v600 = vand.u32 2147483647, %v590
  %vm601 = vcmp.eq.f32.partialorder %v600, 8.507059e+37
  %v602 = vand.u32 %v590, 2147483648
  %v603 = vor.u32 1.1754944e-38, %v602
  %v604 = vsel %vm601, %v603, %v599
  %v605 = vmul.f32 1.0, %v604
  %v606 = vmul.f32 %v585, %v517
  %v607 = vmul.f32 %v585, %v586
  %609 = vrot.lane.b32.xlu0 %v607, 64
  %v610 = vpop.permute.xlu0 %609
  %v612 = vadd.f32 %v606, %v610
  %v613 = vtanh.pop %v612
  %v614 = vmul.f32 %v605, %v613
  %616 = vrot.lane.b32.xlu0 %v614, 64
  %v617 = vpop.permute.xlu0 %616
  %v618 = vsel %vm236, %v617, 0
  %620 = vmatpush.msra.mxu0 0.0
  %621 = vmatpush.msra.mxu0 0.0
  %622 = vmatpush.msra.mxu0 0.0
  %623 = vmatpush.msra.mxu0 0.0
  %624 = vmatpush.msra.mxu0 0.0
  %625 = vmatpush.msra.mxu0 0.0
  %626 = vmatpush.msra.mxu0 0.0
  %627 = vmatpush.msra.mxu0 0.0
  %628 = vmatpush.msra.mxu0 %v45
  %629 = vmatpush.msra.mxu0 %v43
  %630 = vmatpush.msra.mxu0 %v41
  %631 = vmatpush.msra.mxu0 %v39
  %632 = vmatpush.msra.mxu0 %v37
  %633 = vmatpush.msra.mxu0 %v35
  %634 = vmatpush.msra.mxu0 %v33
  %635 = vmatpush.msra.mxu0 %v31
  %636 = vmatmul.f32.gmra.mxu0 %v618
  %v637 = vpop.f32.mrf.mxu0
  %v638 = vadd.f32 %v102, %v637
  %639 = vdwg.mxu0
  %640 = vmatpush.msra.mxu0 0.0
  %641 = vmatpush.msra.mxu0 0.0
  %642 = vmatpush.msra.mxu0 0.0
  %643 = vmatpush.msra.mxu0 0.0
  %644 = vmatpush.msra.mxu0 0.0
  %645 = vmatpush.msra.mxu0 0.0
  %646 = vmatpush.msra.mxu0 0.0
  %647 = vmatpush.msra.mxu0 0.0
  %648 = vmatpush.msra.mxu0 %v46
  %649 = vmatpush.msra.mxu0 %v44
  %650 = vmatpush.msra.mxu0 %v42
  %651 = vmatpush.msra.mxu0 %v40
  %652 = vmatpush.msra.mxu0 %v38
  %653 = vmatpush.msra.mxu0 %v36
  %654 = vmatpush.msra.mxu0 %v34
  %655 = vmatpush.msra.mxu0 %v32
  %656 = vmatmul.f32.gmra.mxu0 %v618
  %v657 = vpop.f32.mrf.mxu0
  %v658 = vadd.f32 %v143, %v657
  %659 = vdwg.mxu0
  %v660 = vadd.f32 %v638, %v181
  %v661 = vadd.f32 %v658, %v222
  %v662 = vxor.u32 %v660, 2147483648
  %v663 = vmul.f32 %v662, 1.442695
  %v664 = vpow.pop %v663
  %v665 = vadd.f32 %v664, 1.0
  %v666 = vrcp.pop %v665
  %v667 = vmul.f32 %v665, %v666
  %v668 = vsub.f32 1.0, %v667
  %v669 = vmul.f32 %v666, %v668
  %v670 = vadd.f32 %v666, %v669
  %vm671 = vweird.f32 %v665
  %vm672 = vweird.f32 %v666
  %vm673 = vmor %vm671, %vm672
  %v674 = vsel %vm673, %v666, %v670
  %v675 = vand.u32 2147483647, %v665
  %vm676 = vcmp.eq.f32.partialorder %v675, 8.507059e+37
  %v677 = vand.u32 %v665, 2147483648
  %v678 = vor.u32 1.1754944e-38, %v677
  %v679 = vsel %vm676, %v678, %v674
  %v680 = vmul.f32 1.0, %v679
  %v681 = vtanh.pop %v661
  %v682 = vxor.u32 %v661, 2147483648
  %v683 = vmul.f32 %v682, 1.442695
  %v684 = vpow.pop %v683
  %v685 = vadd.f32 %v684, 1.0
  %v686 = vrcp.pop %v685
  %v687 = vmul.f32 %v685, %v686
  %v688 = vsub.f32 1.0, %v687
  %v689 = vmul.f32 %v686, %v688
  %v690 = vadd.f32 %v686, %v689
  %vm691 = vweird.f32 %v685
  %vm692 = vweird.f32 %v686
  %vm693 = vmor %vm691, %vm692
  %v694 = vsel %vm693, %v686, %v690
  %v695 = vand.u32 2147483647, %v685
  %vm696 = vcmp.eq.f32.partialorder %v695, 8.507059e+37
  %v697 = vand.u32 %v685, 2147483648
  %v698 = vor.u32 1.1754944e-38, %v697
  %v699 = vsel %vm696, %v698, %v694
  %v700 = vmul.f32 1.0, %v699
  %v701 = vmul.f32 %v680, %v612
  %v702 = vmul.f32 %v680, %v681
  %704 = vrot.lane.b32.xlu0 %v702, 64
  %v705 = vpop.permute.xlu0 %704
  %v707 = vadd.f32 %v701, %v705
  %v708 = vtanh.pop %v707
  %v709 = vmul.f32 %v700, %v708
  %711 = vrot.lane.b32.xlu0 %v709, 64
  %v712 = vpop.permute.xlu0 %711
  %v713 = vsel %vm236, %v712, 0
  %715 = vmatpush.msra.mxu0 0.0
  %716 = vmatpush.msra.mxu0 0.0
  %717 = vmatpush.msra.mxu0 0.0
  %718 = vmatpush.msra.mxu0 0.0
  %719 = vmatpush.msra.mxu0 0.0
  %720 = vmatpush.msra.mxu0 0.0
  %721 = vmatpush.msra.mxu0 0.0
  %722 = vmatpush.msra.mxu0 0.0
  %723 = vmatpush.msra.mxu0 %v45
  %724 = vmatpush.msra.mxu0 %v43
  %725 = vmatpush.msra.mxu0 %v41
  %726 = vmatpush.msra.mxu0 %v39
  %727 = vmatpush.msra.mxu0 %v37
  %728 = vmatpush.msra.mxu0 %v35
  %729 = vmatpush.msra.mxu0 %v33
  %730 = vmatpush.msra.mxu0 %v31
  %731 = vmatmul.f32.gmra.mxu0 %v713
  %v732 = vpop.f32.mrf.mxu0
  %v733 = vadd.f32 %v105, %v732
  %734 = vdwg.mxu0
  %735 = vmatpush.msra.mxu0 0.0
  %736 = vmatpush.msra.mxu0 0.0
  %737 = vmatpush.msra.mxu0 0.0
  %738 = vmatpush.msra.mxu0 0.0
  %739 = vmatpush.msra.mxu0 0.0
  %740 = vmatpush.msra.mxu0 0.0
  %741 = vmatpush.msra.mxu0 0.0
  %742 = vmatpush.msra.mxu0 0.0
  %743 = vmatpush.msra.mxu0 %v46
  %744 = vmatpush.msra.mxu0 %v44
  %745 = vmatpush.msra.mxu0 %v42
  %746 = vmatpush.msra.mxu0 %v40
  %747 = vmatpush.msra.mxu0 %v38
  %748 = vmatpush.msra.mxu0 %v36
  %749 = vmatpush.msra.mxu0 %v34
  %750 = vmatpush.msra.mxu0 %v32
  %751 = vmatmul.f32.gmra.mxu0 %v713
  %v752 = vpop.f32.mrf.mxu0
  %v753 = vadd.f32 %v146, %v752
  %754 = vdwg.mxu0
  %v755 = vadd.f32 %v733, %v178
  %v756 = vadd.f32 %v753, %v219
  %v757 = vxor.u32 %v755, 2147483648
  %v758 = vmul.f32 %v757, 1.442695
  %v759 = vpow.pop %v758
  %v760 = vadd.f32 %v759, 1.0
  %v761 = vrcp.pop %v760
  %v762 = vmul.f32 %v760, %v761
  %v763 = vsub.f32 1.0, %v762
  %v764 = vmul.f32 %v761, %v763
  %v765 = vadd.f32 %v761, %v764
  %vm766 = vweird.f32 %v760
  %vm767 = vweird.f32 %v761
  %vm768 = vmor %vm766, %vm767
  %v769 = vsel %vm768, %v761, %v765
  %v770 = vand.u32 2147483647, %v760
  %vm771 = vcmp.eq.f32.partialorder %v770, 8.507059e+37
  %v772 = vand.u32 %v760, 2147483648
  %v773 = vor.u32 1.1754944e-38, %v772
  %v774 = vsel %vm771, %v773, %v769
  %v775 = vmul.f32 1.0, %v774
  %v776 = vtanh.pop %v756
  %v777 = vxor.u32 %v756, 2147483648
  %v778 = vmul.f32 %v777, 1.442695
  %v779 = vpow.pop %v778
  %v780 = vadd.f32 %v779, 1.0
  %v781 = vrcp.pop %v780
  %v782 = vmul.f32 %v780, %v781
  %v783 = vsub.f32 1.0, %v782
  %v784 = vmul.f32 %v781, %v783
  %v785 = vadd.f32 %v781, %v784
  %vm786 = vweird.f32 %v780
  %vm787 = vweird.f32 %v781
  %vm788 = vmor %vm786, %vm787
  %v789 = vsel %vm788, %v781, %v785
  %v790 = vand.u32 2147483647, %v780
  %vm791 = vcmp.eq.f32.partialorder %v790, 8.507059e+37
  %v792 = vand.u32 %v780, 2147483648
  %v793 = vor.u32 1.1754944e-38, %v792
  %v794 = vsel %vm791, %v793, %v789
  %v795 = vmul.f32 1.0, %v794
  %v796 = vmul.f32 %v775, %v707
  %v797 = vmul.f32 %v775, %v776
  %799 = vrot.lane.b32.xlu0 %v797, 64
  %v800 = vpop.permute.xlu0 %799
  %v802 = vadd.f32 %v796, %v800
  %v803 = vtanh.pop %v802
  %v804 = vmul.f32 %v795, %v803
  %806 = vrot.lane.b32.xlu0 %v804, 64
  %v807 = vpop.permute.xlu0 %806
  %v808 = vsel %vm236, %v807, 0
  %810 = vmatpush.msra.mxu0 0.0
  %811 = vmatpush.msra.mxu0 0.0
  %812 = vmatpush.msra.mxu0 0.0
  %813 = vmatpush.msra.mxu0 0.0
  %814 = vmatpush.msra.mxu0 0.0
  %815 = vmatpush.msra.mxu0 0.0
  %816 = vmatpush.msra.mxu0 0.0
  %817 = vmatpush.msra.mxu0 0.0
  %818 = vmatpush.msra.mxu0 %v45
  %819 = vmatpush.msra.mxu0 %v43
  %820 = vmatpush.msra.mxu0 %v41
  %821 = vmatpush.msra.mxu0 %v39
  %822 = vmatpush.msra.mxu0 %v37
  %823 = vmatpush.msra.mxu0 %v35
  %824 = vmatpush.msra.mxu0 %v33
  %825 = vmatpush.msra.mxu0 %v31
  %826 = vmatmul.f32.gmra.mxu0 %v808
  %v827 = vpop.f32.mrf.mxu0
  %v828 = vadd.f32 %v108, %v827
  %829 = vdwg.mxu0
  %830 = vmatpush.msra.mxu0 0.0
  %831 = vmatpush.msra.mxu0 0.0
  %832 = vmatpush.msra.mxu0 0.0
  %833 = vmatpush.msra.mxu0 0.0
  %834 = vmatpush.msra.mxu0 0.0
  %835 = vmatpush.msra.mxu0 0.0
  %836 = vmatpush.msra.mxu0 0.0
  %837 = vmatpush.msra.mxu0 0.0
  %838 = vmatpush.msra.mxu0 %v46
  %839 = vmatpush.msra.mxu0 %v44
  %840 = vmatpush.msra.mxu0 %v42
  %841 = vmatpush.msra.mxu0 %v40
  %842 = vmatpush.msra.mxu0 %v38
  %843 = vmatpush.msra.mxu0 %v36
  %844 = vmatpush.msra.mxu0 %v34
  %845 = vmatpush.msra.mxu0 %v32
  %846 = vmatmul.f32.gmra.mxu0 %v808
  %v847 = vpop.f32.mrf.mxu0
  %v848 = vadd.f32 %v149, %v847
  %849 = vdwg.mxu0
  %v850 = vadd.f32 %v828, %v175
  %v851 = vadd.f32 %v848, %v216
  %v852 = vxor.u32 %v850, 2147483648
  %v853 = vmul.f32 %v852, 1.442695
  %v854 = vpow.pop %v853
  %v855 = vadd.f32 %v854, 1.0
  %v856 = vrcp.pop %v855
  %v857 = vmul.f32 %v855, %v856
  %v858 = vsub.f32 1.0, %v857
  %v859 = vmul.f32 %v856, %v858
  %v860 = vadd.f32 %v856, %v859
  %vm861 = vweird.f32 %v855
  %vm862 = vweird.f32 %v856
  %vm863 = vmor %vm861, %vm862
  %v864 = vsel %vm863, %v856, %v860
  %v865 = vand.u32 2147483647, %v855
  %vm866 = vcmp.eq.f32.partialorder %v865, 8.507059e+37
  %v867 = vand.u32 %v855, 2147483648
  %v868 = vor.u32 1.1754944e-38, %v867
  %v869 = vsel %vm866, %v868, %v864
  %v870 = vmul.f32 1.0, %v869
  %v871 = vtanh.pop %v851
  %v872 = vxor.u32 %v851, 2147483648
  %v873 = vmul.f32 %v872, 1.442695
  %v874 = vpow.pop %v873
  %v875 = vadd.f32 %v874, 1.0
  %v876 = vrcp.pop %v875
  %v877 = vmul.f32 %v875, %v876
  %v878 = vsub.f32 1.0, %v877
  %v879 = vmul.f32 %v876, %v878
  %v880 = vadd.f32 %v876, %v879
  %vm881 = vweird.f32 %v875
  %vm882 = vweird.f32 %v876
  %vm883 = vmor %vm881, %vm882
  %v884 = vsel %vm883, %v876, %v880
  %v885 = vand.u32 2147483647, %v875
  %vm886 = vcmp.eq.f32.partialorder %v885, 8.507059e+37
  %v887 = vand.u32 %v875, 2147483648
  %v888 = vor.u32 1.1754944e-38, %v887
  %v889 = vsel %vm886, %v888, %v884
  %v890 = vmul.f32 1.0, %v889
  %v891 = vmul.f32 %v870, %v802
  %v892 = vmul.f32 %v870, %v871
  %894 = vrot.lane.b32.xlu0 %v892, 64
  %v895 = vpop.permute.xlu0 %894
  %v897 = vadd.f32 %v891, %v895
  %v898 = vtanh.pop %v897
  %v899 = vmul.f32 %v890, %v898
  %901 = vrot.lane.b32.xlu0 %v899, 64
  %v902 = vpop.permute.xlu0 %901
  %v903 = vsel %vm236, %v902, 0
  %905 = vmatpush.msra.mxu0 0.0
  %906 = vmatpush.msra.mxu0 0.0
  %907 = vmatpush.msra.mxu0 0.0
  %908 = vmatpush.msra.mxu0 0.0
  %909 = vmatpush.msra.mxu0 0.0
  %910 = vmatpush.msra.mxu0 0.0
  %911 = vmatpush.msra.mxu0 0.0
  %912 = vmatpush.msra.mxu0 0.0
  %913 = vmatpush.msra.mxu0 %v45
  %914 = vmatpush.msra.mxu0 %v43
  %915 = vmatpush.msra.mxu0 %v41
  %916 = vmatpush.msra.mxu0 %v39
  %917 = vmatpush.msra.mxu0 %v37
  %918 = vmatpush.msra.mxu0 %v35
  %919 = vmatpush.msra.mxu0 %v33
  %920 = vmatpush.msra.mxu0 %v31
  %921 = vmatmul.f32.gmra.mxu0 %v903
  %v922 = vpop.f32.mrf.mxu0
  %v923 = vadd.f32 %v111, %v922
  %924 = vdwg.mxu0
  %925 = vmatpush.msra.mxu0 0.0
  %926 = vmatpush.msra.mxu0 0.0
  %927 = vmatpush.msra.mxu0 0.0
  %928 = vmatpush.msra.mxu0 0.0
  %929 = vmatpush.msra.mxu0 0.0
  %930 = vmatpush.msra.mxu0 0.0
  %931 = vmatpush.msra.mxu0 0.0
  %932 = vmatpush.msra.mxu0 0.0
  %933 = vmatpush.msra.mxu0 %v46
  %934 = vmatpush.msra.mxu0 %v44
  %935 = vmatpush.msra.mxu0 %v42
  %936 = vmatpush.msra.mxu0 %v40
  %937 = vmatpush.msra.mxu0 %v38
  %938 = vmatpush.msra.mxu0 %v36
  %939 = vmatpush.msra.mxu0 %v34
  %940 = vmatpush.msra.mxu0 %v32
  %941 = vmatmul.f32.gmra.mxu0 %v903
  %v942 = vpop.f32.mrf.mxu0
  %v943 = vadd.f32 %v152, %v942
  %944 = vdwg.mxu0
  %v945 = vadd.f32 %v923, %v172
  %v946 = vadd.f32 %v943, %v213
  %v947 = vxor.u32 %v945, 2147483648
  %v948 = vmul.f32 %v947, 1.442695
  %v949 = vpow.pop %v948
  %v950 = vadd.f32 %v949, 1.0
  %v951 = vrcp.pop %v950
  %v952 = vmul.f32 %v950, %v951
  %v953 = vsub.f32 1.0, %v952
  %v954 = vmul.f32 %v951, %v953
  %v955 = vadd.f32 %v951, %v954
  %vm956 = vweird.f32 %v950
  %vm957 = vweird.f32 %v951
  %vm958 = vmor %vm956, %vm957
  %v959 = vsel %vm958, %v951, %v955
  %v960 = vand.u32 2147483647, %v950
  %vm961 = vcmp.eq.f32.partialorder %v960, 8.507059e+37
  %v962 = vand.u32 %v950, 2147483648
  %v963 = vor.u32 1.1754944e-38, %v962
  %v964 = vsel %vm961, %v963, %v959
  %v965 = vmul.f32 1.0, %v964
  %v966 = vtanh.pop %v946
  %v967 = vxor.u32 %v946, 2147483648
  %v968 = vmul.f32 %v967, 1.442695
  %v969 = vpow.pop %v968
  %v970 = vadd.f32 %v969, 1.0
  %v971 = vrcp.pop %v970
  %v972 = vmul.f32 %v970, %v971
  %v973 = vsub.f32 1.0, %v972
  %v974 = vmul.f32 %v971, %v973
  %v975 = vadd.f32 %v971, %v974
  %vm976 = vweird.f32 %v970
  %vm977 = vweird.f32 %v971
  %vm978 = vmor %vm976, %vm977
  %v979 = vsel %vm978, %v971, %v975
  %v980 = vand.u32 2147483647, %v970
  %vm981 = vcmp.eq.f32.partialorder %v980, 8.507059e+37
  %v982 = vand.u32 %v970, 2147483648
  %v983 = vor.u32 1.1754944e-38, %v982
  %v984 = vsel %vm981, %v983, %v979
  %v985 = vmul.f32 1.0, %v984
  %v986 = vmul.f32 %v965, %v897
  %v987 = vmul.f32 %v965, %v966
  %989 = vrot.lane.b32.xlu0 %v987, 64
  %v990 = vpop.permute.xlu0 %989
  %v992 = vadd.f32 %v986, %v990
  %v993 = vtanh.pop %v992
  %v994 = vmul.f32 %v985, %v993
  %v995 = vlaneseq
  %v996 = vand.u32 %v995, 127
  %vm997 = vcmp.lt.s32.totalorder %v996, 32
  %1000 = vrot.lane.b32.xlu0 %v994, 64
  %v1001 = vpop.permute.xlu0 %1000
  %v1003 = vsel %vm997, %v332, %v1001
  %v1006 = vsel %vm997, %v427, %v902
  %v1009 = vsel %vm997, %v522, %v807
  %v1012 = vsel %vm997, %v617, %v712
  %v1013 = vsel %vm997, %v712, %v617
  %v1014 = vsel %vm997, %v807, %v522
  %v1015 = vsel %vm997, %v902, %v427
  %v1016 = vsel %vm997, %v1001, %v332
  %v1017 = vld [vmem:[%s2] sm:$0xff]
  %v1018 = vld [vmem:[%s2 + $0x8] sm:$0xff]
  %v1019 = vld [vmem:[%s2 + $0x10] sm:$0xff]
  %v1020 = vld [vmem:[%s2 + $0x18] sm:$0xff]
  %v1021 = vld [vmem:[%s2 + $0x20] sm:$0xff]
  %v1022 = vld [vmem:[%s2 + $0x28] sm:$0xff]
  %v1023 = vld [vmem:[%s2 + $0x30] sm:$0xff]
  %v1024 = vld [vmem:[%s2 + $0x38] sm:$0xff]
  %v1025 = vld [vmem:[%s2 + $0xd0] sm:$0x1]
  %v1026 = vperm.slane %v1025, 0
  %v1028 = vsel %vm236, %v1003, 0
  %v1031 = vsel %vm236, %v1006, 0
  %v1034 = vsel %vm236, %v1009, 0
  %v1037 = vsel %vm236, %v1012, 0
  %v1040 = vsel %vm236, %v1013, 0
  %v1043 = vsel %vm236, %v1014, 0
  %v1046 = vsel %vm236, %v1015, 0
  %v1049 = vsel %vm236, %v1016, 0
  %1051 = vmatpush.msra.mxu0 0.0
  %1052 = vmatpush.msra.mxu0 0.0
  %1053 = vmatpush.msra.mxu0 0.0
  %1054 = vmatpush.msra.mxu0 0.0
  %1055 = vmatpush.msra.mxu0 0.0
  %1056 = vmatpush.msra.mxu0 0.0
  %1057 = vmatpush.msra.mxu0 0.0
  %1058 = vmatpush.msra.mxu0 0.0
  %1059 = vmatpush.msra.mxu0 %v1024
  %1060 = vmatpush.msra.mxu0 %v1023
  %1061 = vmatpush.msra.mxu0 %v1022
  %1062 = vmatpush.msra.mxu0 %v1021
  %1063 = vmatpush.msra.mxu0 %v1020
  %1064 = vmatpush.msra.mxu0 %v1019
  %1065 = vmatpush.msra.mxu0 %v1018
  %1066 = vmatpush.msra.mxu0 %v1017
  %1067 = vmatmul.f32.gmra.mxu0 %v1028
  %v1068 = vpop.f32.mrf.mxu0
  %v1069 = vadd.f32 %v1026, %v1068
  %1070 = vmatmul.f32.gmra.mxu0 %v1031
  %v1071 = vpop.f32.mrf.mxu0
  %v1072 = vadd.f32 %v1026, %v1071
  %1073 = vmatmul.f32.gmra.mxu0 %v1034
  %v1074 = vpop.f32.mrf.mxu0
  %v1075 = vadd.f32 %v1026, %v1074
  %1076 = vmatmul.f32.gmra.mxu0 %v1037
  %v1077 = vpop.f32.mrf.mxu0
  %v1078 = vadd.f32 %v1026, %v1077
  %1079 = vmatmul.f32.gmra.mxu0 %v1040
  %v1080 = vpop.f32.mrf.mxu0
  %v1081 = vadd.f32 %v1026, %v1080
  %1082 = vmatmul.f32.gmra.mxu0 %v1043
  %v1083 = vpop.f32.mrf.mxu0
  %v1084 = vadd.f32 %v1026, %v1083
  %1085 = vmatmul.f32.gmra.mxu0 %v1046
  %v1086 = vpop.f32.mrf.mxu0
  %v1087 = vadd.f32 %v1026, %v1086
  %1088 = vmatmul.f32.gmra.mxu0 %v1049
  %v1089 = vpop.f32.mrf.mxu0
  %v1090 = vadd.f32 %v1026, %v1089
  %1091 = vdwg.mxu0
  %v1092 = vsel %vm47, %v1069, -inf
  %1093 = vmax.xlane.f32.xlu0 %v1092
  %v1094 = vpop.xlane.xlu0 %1093
  %v1095 = vsel %vm47, %v1072, -inf
  %1096 = vmax.xlane.f32.xlu0 %v1095
  %v1097 = vpop.xlane.xlu0 %1096
  %v1098 = vsel %vm47, %v1075, -inf
  %1099 = vmax.xlane.f32.xlu0 %v1098
  %v1100 = vpop.xlane.xlu0 %1099
  %v1101 = vsel %vm47, %v1078, -inf
  %1102 = vmax.xlane.f32.xlu0 %v1101
  %v1103 = vpop.xlane.xlu0 %1102
  %v1104 = vsel %vm47, %v1081, -inf
  %1105 = vmax.xlane.f32.xlu0 %v1104
  %v1106 = vpop.xlane.xlu0 %1105
  %v1107 = vsel %vm47, %v1084, -inf
  %1108 = vmax.xlane.f32.xlu0 %v1107
  %v1109 = vpop.xlane.xlu0 %1108
  %v1110 = vsel %vm47, %v1087, -inf
  %1111 = vmax.xlane.f32.xlu0 %v1110
  %v1112 = vpop.xlane.xlu0 %1111
  %v1113 = vsel %vm47, %v1090, -inf
  %1114 = vmax.xlane.f32.xlu0 %v1113
  %v1115 = vpop.xlane.xlu0 %1114
  %v1116 = vsub.f32 %v1069, %v1094
  %v1117 = vsub.f32 %v1072, %v1097
  %v1118 = vsub.f32 %v1075, %v1100
  %v1119 = vsub.f32 %v1078, %v1103
  %v1120 = vsub.f32 %v1081, %v1106
  %v1121 = vsub.f32 %v1084, %v1109
  %v1122 = vsub.f32 %v1087, %v1112
  %v1123 = vsub.f32 %v1090, %v1115
  %v1124 = vmul.f32 %v1116, 1.442695
  %v1125 = vpow.pop %v1124
  %v1126 = vmul.f32 %v1117, 1.442695
  %v1127 = vpow.pop %v1126
  %v1128 = vmul.f32 %v1118, 1.442695
  %v1129 = vpow.pop %v1128
  %v1130 = vmul.f32 %v1119, 1.442695
  %v1131 = vpow.pop %v1130
  %v1132 = vmul.f32 %v1120, 1.442695
  %v1133 = vpow.pop %v1132
  %v1134 = vmul.f32 %v1121, 1.442695
  %v1135 = vpow.pop %v1134
  %v1136 = vmul.f32 %v1122, 1.442695
  %v1137 = vpow.pop %v1136
  %v1138 = vmul.f32 %v1123, 1.442695
  %v1139 = vpow.pop %v1138
  %v1140 = vsel %vm47, %v1125, 0.0
  %1141 = vadd.xlane.f32.xlu0 %v1140
  %v1142 = vpop.xlane.xlu0 %1141
  %v1143 = vsel %vm47, %v1127, 0.0
  %1144 = vadd.xlane.f32.xlu0 %v1143
  %v1145 = vpop.xlane.xlu0 %1144
  %v1146 = vsel %vm47, %v1129, 0.0
  %1147 = vadd.xlane.f32.xlu0 %v1146
  %v1148 = vpop.xlane.xlu0 %1147
  %v1149 = vsel %vm47, %v1131, 0.0
  %1150 = vadd.xlane.f32.xlu0 %v1149
  %v1151 = vpop.xlane.xlu0 %1150
  %v1152 = vsel %vm47, %v1133, 0.0
  %1153 = vadd.xlane.f32.xlu0 %v1152
  %v1154 = vpop.xlane.xlu0 %1153
  %v1155 = vsel %vm47, %v1135, 0.0
  %1156 = vadd.xlane.f32.xlu0 %v1155
  %v1157 = vpop.xlane.xlu0 %1156
  %v1158 = vsel %vm47, %v1137, 0.0
  %1159 = vadd.xlane.f32.xlu0 %v1158
  %v1160 = vpop.xlane.xlu0 %1159
  %v1161 = vsel %vm47, %v1139, 0.0
  %1162 = vadd.xlane.f32.xlu0 %v1161
  %v1163 = vpop.xlane.xlu0 %1162
  %v1164 = vrcp.pop %v1142
  %v1165 = vrcp.pop %v1145
  %v1166 = vrcp.pop %v1148
  %v1167 = vrcp.pop %v1151
  %v1168 = vrcp.pop %v1154
  %v1169 = vrcp.pop %v1157
  %v1170 = vrcp.pop %v1160
  %v1171 = vrcp.pop %v1163
  %v1172 = vmul.f32 %v1125, %v1164
  %v1173 = vmul.f32 %v1127, %v1165
  %v1174 = vmul.f32 %v1129, %v1166
  %v1175 = vmul.f32 %v1131, %v1167
  %v1176 = vmul.f32 %v1133, %v1168
  %v1177 = vmul.f32 %v1135, %v1169
  %v1178 = vmul.f32 %v1137, %v1170
  %v1179 = vmul.f32 %v1139, %v1171
  %1180 = vst.msk [vmem:[%s3] sm:$0xff] %vm47, %v1172
  %1181 = vst.msk [vmem:[%s3 + $0x8] sm:$0xff] %vm47, %v1173
  %1182 = vst.msk [vmem:[%s3 + $0x10] sm:$0xff] %vm47, %v1174
  %1183 = vst.msk [vmem:[%s3 + $0x18] sm:$0xff] %vm47, %v1175
  %1184 = vst.msk [vmem:[%s3 + $0x20] sm:$0xff] %vm47, %v1176
  %1185 = vst.msk [vmem:[%s3 + $0x28] sm:$0xff] %vm47, %v1177
  %1186 = vst.msk [vmem:[%s3 + $0x30] sm:$0xff] %vm47, %v1178
  %1187 = vst.msk [vmem:[%s3 + $0x38] sm:$0xff] %vm47, %v1179
  %1189 = vrot.lane.b32.xlu0 %v1173, 16
  %v1190 = vpop.permute.xlu0 %1189
  %1193 = vrot.lane.b32.xlu0 %v1174, 32
  %v1194 = vpop.permute.xlu0 %1193
  %1197 = vrot.lane.b32.xlu0 %v1175, 48
  %v1198 = vpop.permute.xlu0 %1197
  %1201 = vrot.lane.b32.xlu0 %v1176, 64
  %v1202 = vpop.permute.xlu0 %1201
  %1205 = vrot.lane.b32.xlu0 %v1177, 80
  %v1206 = vpop.permute.xlu0 %1205
  %1209 = vrot.lane.b32.xlu0 %v1178, 96
  %v1210 = vpop.permute.xlu0 %1209
  %1213 = vrot.lane.b32.xlu0 %v1179, 112
  %v1214 = vpop.permute.xlu0 %1213
  %v1216 = vsel %vm47, %v1172, %v1190
  %vm1217 = vcmask 261120
  %v1218 = vsel %vm1217, %v1216, %v1194
  %vm1219 = vcmask 392192
  %v1220 = vsel %vm1219, %v1218, %v1198
  %v1221 = vsel %vm236, %v1220, %v1202
  %vm1222 = vcmask 654336
  %v1223 = vsel %vm1222, %v1221, %v1206
  %vm1224 = vcmask 785408
  %v1225 = vsel %vm1224, %v1223, %v1210
  %vm1226 = vcmask 916480
  %v1227 = vsel %vm1226, %v1225, %v1214
  %v1228 = vld [vmem:[%s2 + $0x40] sm:$0xff]
  %v1229 = vld [vmem:[%s2 + $0x48] sm:$0xff]
  %v1230 = vld [vmem:[%s2 + $0x50] sm:$0xff]
  %v1231 = vld [vmem:[%s2 + $0x58] sm:$0xff]
  %v1232 = vld [vmem:[%s2 + $0x60] sm:$0xff]
  %v1233 = vld [vmem:[%s2 + $0x68] sm:$0xff]
  %v1234 = vld [vmem:[%s2 + $0x70] sm:$0xff]
  %v1235 = vld [vmem:[%s2 + $0x78] sm:$0xff]
  %v1236 = vld [vmem:[%s2 + $0x80] sm:$0xff]
  %v1237 = vld [vmem:[%s2 + $0x88] sm:$0xff]
  %v1238 = vld [vmem:[%s2 + $0x90] sm:$0xff]
  %v1239 = vld [vmem:[%s2 + $0x98] sm:$0xff]
  %v1240 = vld [vmem:[%s2 + $0xa0] sm:$0xff]
  %v1241 = vld [vmem:[%s2 + $0xa8] sm:$0xff]
  %v1242 = vld [vmem:[%s2 + $0xb0] sm:$0xff]
  %v1243 = vld [vmem:[%s2 + $0xb8] sm:$0xff]
  %v1244 = vld [vmem:[%s2 + $0xc0] sm:$0xff]
  %v1245 = vld [vmem:[%s2 + $0xc8] sm:$0xff]
  %v1246 = vld [vmem:[%s2 + $0xd1] sm:$0x1]
  %v1247 = vperm.slane %v1246, 0
  %v1249 = vsel %vm47, %v22, 0
  %1251 = vmatpush.msra.mxu0 %v1243
  %1252 = vmatpush.msra.mxu0 %v1242
  %1253 = vmatpush.msra.mxu0 %v1241
  %1254 = vmatpush.msra.mxu0 %v1240
  %1255 = vmatpush.msra.mxu0 %v1239
  %1256 = vmatpush.msra.mxu0 %v1238
  %1257 = vmatpush.msra.mxu0 %v1237
  %1258 = vmatpush.msra.mxu0 %v1236
  %1259 = vmatpush.msra.mxu0 %v1235
  %1260 = vmatpush.msra.mxu0 %v1234
  %1261 = vmatpush.msra.mxu0 %v1233
  %1262 = vmatpush.msra.mxu0 %v1232
  %1263 = vmatpush.msra.mxu0 %v1231
  %1264 = vmatpush.msra.mxu0 %v1230
  %1265 = vmatpush.msra.mxu0 %v1229
  %1266 = vmatpush.msra.mxu0 %v1228
  %1267 = vmatmul.f32.gmra.mxu0 %v1227
  %v1268 = vpop.f32.mrf.mxu0
  %v1269 = vadd.f32 %v1247, %v1268
  %1270 = vdwg.mxu0
  %1271 = vmatpush.msra.mxu0 0.0
  %1272 = vmatpush.msra.mxu0 0.0
  %1273 = vmatpush.msra.mxu0 0.0
  %1274 = vmatpush.msra.mxu0 0.0
  %1275 = vmatpush.msra.mxu0 0.0
  %1276 = vmatpush.msra.mxu0 0.0
  %1277 = vmatpush.msra.mxu0 0.0
  %1278 = vmatpush.msra.mxu0 0.0
  %1279 = vmatpush.msra.mxu0 0.0
  %1280 = vmatpush.msra.mxu0 0.0
  %1281 = vmatpush.msra.mxu0 0.0
  %1282 = vmatpush.msra.mxu0 0.0
  %1283 = vmatpush.msra.mxu0 0.0
  %1284 = vmatpush.msra.mxu0 0.0
  %1285 = vmatpush.msra.mxu0 %v1245
  %1286 = vmatpush.msra.mxu0 %v1244
  %1287 = vmatmul.f32.gmra.mxu0 %v1249
  %v1288 = vpop.f32.mrf.mxu0
  %v1289 = vadd.f32 %v1269, %v1288
  %1290 = vdwg.mxu0
  %1291 = vst.msk [vmem:[%s3 + $0x40] sm:$0xff] %vm47, %v1289
  // Predicated region
  $region14: #{filler_tpe_forward.1} parent=0 // pred_check
    _
  $region15: #{filler_tpe_forward.1} parent=0 // pred_check_branch
    %1293 = sbr.rel (0) target = $region17
  $region16: #{filler_tpe_forward.1} parent=0 // pred_region
    _
  $region17: #{filler_tpe_forward.1} parent=0 // pred_fallthru
    _
  // Predicated region
  $region18: #{filler_tpe_forward.1} parent=0 // pred_check
    _
  $region19: #{filler_tpe_forward.1} parent=0 // pred_check_branch
    %1295 = sbr.rel (0) target = $region21
  $region20: #{filler_tpe_forward.1} parent=0 // pred_region
    _
  $region21: #{filler_tpe_forward.1} parent=0 // pred_fallthru
    _

</llo_original>
